<compile_context>
chip_gen: v7x
topology: tpu7x:2x2x1
jax: 0.10.0
libtpu: 0.0.40
codegen_flags: <defaults>
</compile_context>

<pallas_src>
import functools

import jax
import jax.numpy as jnp
from jax.experimental import pallas as pl
from jax.experimental.pallas import tpu as pltpu


def _stacked_act_kernel(x_ref, w_ref, shift_ref, o_ref, xpad_ref, *,
                        K, H, W, P, Cb, HS):
    """x_ref:     (1, 1, H, W*Cb)      lane-packed activated-conv input
       w_ref:     (1, K*K, W*Cb)       BN-folded taps, tiled per-channel over W
       shift_ref: (1, 1, W*Cb)         BN-folded per-channel shift
       o_ref:     (1, 1, H, W*Cb)
       xpad_ref:  (H+2P, (W+2P)*Cb)    f32 VMEM scratch (padded activated slab)."""
    Lout = W * Cb
    Lpad = (W + 2 * P) * Cb
    PC = P * Cb

    # --- Build the padded, activated slab: zero ONLY the halo frame. ---------
    if P > 0:
        xpad_ref[0:P, :] = jnp.zeros((P, Lpad), jnp.float32)                 # top
        xpad_ref[P + H:P + H + P, :] = jnp.zeros((P, Lpad), jnp.float32)     # bottom
        xpad_ref[P:P + H, 0:PC] = jnp.zeros((H, PC), jnp.float32)            # left
        xpad_ref[P:P + H, PC + Lout:Lpad] = jnp.zeros((H, PC), jnp.float32)  # right

    # Activated interior (padding applied AFTER activation, so this stays
    # correct even for activations with act(0) != 0).
    # TODO(synk): StackedAct.act() is abstract in the reference module; ReLU assumed.
    xpad_ref[P:P + H, PC:PC + Lout] = jnp.maximum(
        x_ref[0, 0], 0.0).astype(jnp.float32)

    shift = shift_ref[0]                       # (1, Lout) — broadcasts over sublanes

    # --- Depthwise conv: H processed in strips, one small accumulator each. --
    row0 = 0
    while row0 < H:                            # static Python loop (H, HS static)
        hs = min(HS, H - row0)
        acc = jnp.zeros((hs, Lout), jnp.float32)
        for i in range(K):
            for j in range(K):
                # Tap window loaded directly from VMEM (vld overlaps with VALU).
                win = xpad_ref[row0 + i:row0 + i + hs, j * Cb:j * Cb + Lout]
                t = i * K + j
                wt = w_ref[0, t:t + 1, :]      # (1, Lout) tap weights
                acc = acc + wt * win
        # Fused epilogue: conv bias + BatchNorm collapsed into one shift.
        o_ref[0, 0, row0:row0 + hs, :] = (acc + shift).astype(o_ref.dtype)
        row0 += HS


def stacked_act_forward(x, conv_w, conv_b, bn_gamma, bn_beta, bn_mean, bn_var,
                        *, act_num=3, eps=1e-5):
    """x: (N, C, H, W).  conv_w: (C, K, K) depthwise filters, K = 2*act_num+1."""
    N, C, H, W = x.shape
    K = 2 * act_num + 1
    P = act_num

    # Fold BatchNorm (inference mode) into the conv:
    #   scale = gamma / sqrt(var + eps)
    #   y = conv(act(x); w*scale) + (b - mean)*scale + beta
    scale = (bn_gamma * jax.lax.rsqrt(bn_var + eps)).astype(jnp.float32)       # (C,)
    w_s = conv_w.astype(jnp.float32) * scale[:, None, None]                    # (C,K,K)
    shift = ((conv_b - bn_mean) * scale + bn_beta).astype(jnp.float32)         # (C,)

    # Channel-block size: full C in lanes when it fits, else 128-wide blocks.
    if C <= 128:
        Cb, G = C, 1
    else:
        # TODO(synk): C > 128 path requires C % 128 == 0 (functional gap only).
        assert C % 128 == 0, "C > 128 must be a multiple of 128 for this kernel"
        Cb, G = 128, C // 128

    Lout = W * Cb

    # Lane-packed layout: (N, C, H, W) -> (N, G, H, W*Cb) with channel minor.
    x_t = (x.reshape(N, G, Cb, H, W)
             .transpose(0, 1, 3, 4, 2)
             .reshape(N, G, H, Lout))

    # Tap table (G, K*K, W*Cb): lane l = w*Cb + c carries the tap of channel c.
    w_t = jnp.tile(w_s.reshape(G, Cb, K * K).transpose(0, 2, 1), (1, 1, W))
    shift_t = jnp.tile(shift.reshape(G, 1, Cb), (1, 1, W))                     # (G,1,W*Cb)

    # H-strip size: keep the f32 accumulator around <= 8 vregs (~32 KiB).
    HS = min(H, max(8, (8192 // max(Lout, 1)) // 8 * 8))

    kernel = functools.partial(_stacked_act_kernel, K=K, H=H, W=W, P=P, Cb=Cb, HS=HS)

    # VMEM budget derived from the actual block + scratch footprint
    # (double-buffered in/out), capped below v7x's 64 MiB physical VMEM.
    isz = x.dtype.itemsize
    need = (2 * (H * Lout * isz)                       # x block (double buffered)
            + 2 * (H * Lout * isz)                     # out block
            + 2 * (K * K * Lout * 4)                   # tap table
            + 2 * (Lout * 4)                           # shift
            + (H + 2 * P) * (W + 2 * P) * Cb * 4)      # padded slab scratch
    vmem_limit = int(min(max(need * 2, 16 * 1024 * 1024), 48 * 1024 * 1024))

    out = pl.pallas_call(
        kernel,
        out_shape=jax.ShapeDtypeStruct((N, G, H, Lout), x.dtype),
        grid_spec=pltpu.PrefetchScalarGridSpec(
            num_scalar_prefetch=0,
            grid=(N, G),
            in_specs=[
                pl.BlockSpec((1, 1, H, Lout), lambda n, g: (n, g, 0, 0)),      # x
                pl.BlockSpec((1, K * K, Lout), lambda n, g: (g, 0, 0)),        # taps
                pl.BlockSpec((1, 1, Lout), lambda n, g: (g, 0, 0)),            # shift
            ],
            out_specs=pl.BlockSpec((1, 1, H, Lout), lambda n, g: (n, g, 0, 0)),
            scratch_shapes=[
                pltpu.VMEM((H + 2 * P, (W + 2 * P) * Cb), jnp.float32)],
        ),
        compiler_params=pltpu.CompilerParams(
            dimension_semantics=("parallel", "parallel"),
            vmem_limit_bytes=vmem_limit,
            allow_input_fusion=[True, False, False],   # fuse the input repack
        ),
    )(x_t, w_t, shift_t)

    # Back to NCHW (layout plumbing only; vanishes in an NHWC-native model).
    return (out.reshape(N, G, H, W, Cb)
               .transpose(0, 1, 4, 2, 3)
               .reshape(N, C, H, W))


def _reference(x, conv_w, conv_b, gamma, beta, mean, var, *, act_num=3, eps=1e-5):
    """Pure-JAX reference of the same forward (for correctness check)."""
    N, C, H, W = x.shape
    K = 2 * act_num + 1
    xr = jnp.maximum(x, 0.0)
    w = conv_w.reshape(C, 1, K, K)
    y = jax.lax.conv_general_dilated(
        xr, w, window_strides=(1, 1),
        padding=[(act_num, act_num), (act_num, act_num)],
        dimension_numbers=("NCHW", "OIHW", "NCHW"),
        feature_group_count=C)
    y = y + conv_b[None, :, None, None]
    y = ((y - mean[None, :, None, None])
         * jax.lax.rsqrt(var[None, :, None, None] + eps)
         * gamma[None, :, None, None]
         + beta[None, :, None, None])
    return y


if __name__ == "__main__":
    N, C, H, W = 2, 4, 16, 16
    act_num = 3
    K = 2 * act_num + 1

    key = jax.random.PRNGKey(0)
    k1, k2, k3, k4, k5, k6, k7 = jax.random.split(key, 7)

    x = jax.random.normal(k1, (N, C, H, W), jnp.float32)
    conv_w = 0.1 * jax.random.normal(k2, (C, K, K), jnp.float32)   # Conv2d weight (C,1,K,K) squeezed
    conv_b = 0.1 * jax.random.normal(k3, (C,), jnp.float32)        # Conv2d bias
    bn_gamma = 1.0 + 0.1 * jax.random.normal(k4, (C,), jnp.float32)
    bn_beta = 0.1 * jax.random.normal(k5, (C,), jnp.float32)
    bn_mean = 0.1 * jax.random.normal(k6, (C,), jnp.float32)
    bn_var = jnp.abs(jax.random.normal(k7, (C,), jnp.float32)) + 0.5

    out = stacked_act_forward(x, conv_w, conv_b, bn_gamma, bn_beta, bn_mean,
                              bn_var, act_num=act_num)
    out = jax.block_until_ready(out)

    ref = _reference(x, conv_w, conv_b, bn_gamma, bn_beta, bn_mean, bn_var,
                     act_num=act_num)
    assert out.shape == (N, C, H, W)
    assert jnp.allclose(out, ref, atol=2e-4, rtol=2e-4), "mismatch vs reference"

    print("KERNEL_OK")
</pallas_src>

<mosaic_0001>
module attributes {stable_mosaic.version = 11 : i64} {
  func.func @_stacked_act_kernel(%arg0: i32, %arg1: i32, %arg2: memref<1x1x16x64xf32, #tpu.memory_space<vmem>>, %arg3: memref<1x49x64xf32, #tpu.memory_space<vmem>>, %arg4: memref<1x1x64xf32, #tpu.memory_space<vmem>>, %arg5: memref<1x1x16x64xf32, #tpu.memory_space<vmem>>, %arg6: memref<22x88xf32, #tpu.memory_space<vmem>>) attributes {dimension_semantics = [#tpu.dimension_semantics<parallel>, #tpu.dimension_semantics<parallel>], iteration_bounds = array<i64: 2, 1>, scalar_prefetch = 0 : i64, scratch_operands = 1 : i64, tpu.core_type = #tpu.core_type<tc>, window_params = [{transform_indices = @transform_0, window_bounds = array<i64: 1, 1, 16, 64>}, {transform_indices = @transform_1, window_bounds = array<i64: 1, 49, 64>}, {transform_indices = @transform_2, window_bounds = array<i64: 1, 1, 64>}, {transform_indices = @transform_3, window_bounds = array<i64: 1, 1, 16, 64>}]} {
    %cst = arith.constant 0.000000e+00 : f32
    %0 = vector.broadcast %cst : f32 to vector<3x88xf32>
    %c0 = arith.constant 0 : index
    %c0_0 = arith.constant 0 : index
    %1 = vector.load %arg6[%c0, %c0_0] : memref<22x88xf32, #tpu.memory_space<vmem>>, vector<3x88xf32>
    tpu.vector_store %arg6[%c0, %c0_0], %0 {strides = array<i32>} : memref<22x88xf32, #tpu.memory_space<vmem>>, vector<3x88xf32>,
    %cst_1 = arith.constant 0.000000e+00 : f32
    %2 = vector.broadcast %cst_1 : f32 to vector<3x88xf32>
    %c19 = arith.constant 19 : index
    %c0_2 = arith.constant 0 : index
    %3 = vector.load %arg6[%c19, %c0_2] : memref<22x88xf32, #tpu.memory_space<vmem>>, vector<3x88xf32>
    tpu.vector_store %arg6[%c19, %c0_2], %2 {strides = array<i32>} : memref<22x88xf32, #tpu.memory_space<vmem>>, vector<3x88xf32>,
    %cst_3 = arith.constant 0.000000e+00 : f32
    %4 = vector.broadcast %cst_3 : f32 to vector<16x12xf32>
    %c3 = arith.constant 3 : index
    %c0_4 = arith.constant 0 : index
    %5 = vector.load %arg6[%c3, %c0_4] : memref<22x88xf32, #tpu.memory_space<vmem>>, vector<16x12xf32>
    tpu.vector_store %arg6[%c3, %c0_4], %4 {strides = array<i32>} : memref<22x88xf32, #tpu.memory_space<vmem>>, vector<16x12xf32>,
    %cst_5 = arith.constant 0.000000e+00 : f32
    %6 = vector.broadcast %cst_5 : f32 to vector<16x12xf32>
    %c3_6 = arith.constant 3 : index
    %c76 = arith.constant 76 : index
    %7 = vector.load %arg6[%c3_6, %c76] : memref<22x88xf32, #tpu.memory_space<vmem>>, vector<16x12xf32>
    tpu.vector_store %arg6[%c3_6, %c76], %6 {strides = array<i32>} : memref<22x88xf32, #tpu.memory_space<vmem>>, vector<16x12xf32>,
    %c0_7 = arith.constant 0 : index
    %c0_8 = arith.constant 0 : index
    %c0_9 = arith.constant 0 : index
    %c0_10 = arith.constant 0 : index
    %8 = vector.load %arg2[%c0_7, %c0_8, %c0_9, %c0_10] : memref<1x1x16x64xf32, #tpu.memory_space<vmem>>, vector<1x1x16x64xf32>
    %9 = vector.shape_cast %8 : vector<1x1x16x64xf32> to vector<16x64xf32>
    %cst_11 = arith.constant 0.000000e+00 : f32
    %10 = vector.broadcast %cst_11 : f32 to vector<16x64xf32>
    %11 = arith.maximumf %9, %10 : vector<16x64xf32>
    %c3_12 = arith.constant 3 : index
    %c12 = arith.constant 12 : index
    %12 = vector.load %arg6[%c3_12, %c12] : memref<22x88xf32, #tpu.memory_space<vmem>>, vector<16x64xf32>
    tpu.vector_store %arg6[%c3_12, %c12], %11 {strides = array<i32>} : memref<22x88xf32, #tpu.memory_space<vmem>>, vector<16x64xf32>,
    %c0_13 = arith.constant 0 : index
    %c0_14 = arith.constant 0 : index
    %c0_15 = arith.constant 0 : index
    %13 = vector.load %arg4[%c0_13, %c0_14, %c0_15] : memref<1x1x64xf32, #tpu.memory_space<vmem>>, vector<1x1x64xf32>
    %14 = vector.shape_cast %13 : vector<1x1x64xf32> to vector<1x64xf32>
    %cst_16 = arith.constant 0.000000e+00 : f32
    %15 = vector.broadcast %cst_16 : f32 to vector<16x64xf32>
    %c0_17 = arith.constant 0 : index
    %c0_18 = arith.constant 0 : index
    %16 = vector.load %arg6[%c0_17, %c0_18] : memref<22x88xf32, #tpu.memory_space<vmem>>, vector<16x64xf32>
    %c0_19 = arith.constant 0 : index
    %c0_20 = arith.constant 0 : index
    %c0_21 = arith.constant 0 : index
    %17 = vector.load %arg3[%c0_19, %c0_20, %c0_21] : memref<1x49x64xf32, #tpu.memory_space<vmem>>, vector<1x1x64xf32>
    %18 = vector.shape_cast %17 : vector<1x1x64xf32> to vector<1x64xf32>
    %19 = vector.broadcast %18 : vector<1x64xf32> to vector<16x64xf32>
    %20 = arith.mulf %19, %16 : vector<16x64xf32>
    %21 = arith.addf %15, %20 : vector<16x64xf32>
    %c0_22 = arith.constant 0 : index
    %c4 = arith.constant 4 : index
    %22 = vector.load %arg6[%c0_22, %c4] : memref<22x88xf32, #tpu.memory_space<vmem>>, vector<16x64xf32>
    %c0_23 = arith.constant 0 : index
    %c1 = arith.constant 1 : index
    %c0_24 = arith.constant 0 : index
    %23 = vector.load %arg3[%c0_23, %c1, %c0_24] : memref<1x49x64xf32, #tpu.memory_space<vmem>>, vector<1x1x64xf32>
    %24 = vector.shape_cast %23 : vector<1x1x64xf32> to vector<1x64xf32>
    %25 = vector.broadcast %24 : vector<1x64xf32> to vector<16x64xf32>
    %26 = arith.mulf %25, %22 : vector<16x64xf32>
    %27 = arith.addf %21, %26 : vector<16x64xf32>
    %c0_25 = arith.constant 0 : index
    %c8 = arith.constant 8 : index
    %28 = vector.load %arg6[%c0_25, %c8] : memref<22x88xf32, #tpu.memory_space<vmem>>, vector<16x64xf32>
    %c0_26 = arith.constant 0 : index
    %c2 = arith.constant 2 : index
    %c0_27 = arith.constant 0 : index
    %29 = vector.load %arg3[%c0_26, %c2, %c0_27] : memref<1x49x64xf32, #tpu.memory_space<vmem>>, vector<1x1x64xf32>
    %30 = vector.shape_cast %29 : vector<1x1x64xf32> to vector<1x64xf32>
    %31 = vector.broadcast %30 : vector<1x64xf32> to vector<16x64xf32>
    %32 = arith.mulf %31, %28 : vector<16x64xf32>
    %33 = arith.addf %27, %32 : vector<16x64xf32>
    %c0_28 = arith.constant 0 : index
    %c12_29 = arith.constant 12 : index
    %34 = vector.load %arg6[%c0_28, %c12_29] : memref<22x88xf32, #tpu.memory_space<vmem>>, vector<16x64xf32>
    %c0_30 = arith.constant 0 : index
    %c3_31 = arith.constant 3 : index
    %c0_32 = arith.constant 0 : index
    %35 = vector.load %arg3[%c0_30, %c3_31, %c0_32] : memref<1x49x64xf32, #tpu.memory_space<vmem>>, vector<1x1x64xf32>
    %36 = vector.shape_cast %35 : vector<1x1x64xf32> to vector<1x64xf32>
    %37 = vector.broadcast %36 : vector<1x64xf32> to vector<16x64xf32>
    %38 = arith.mulf %37, %34 : vector<16x64xf32>
    %39 = arith.addf %33, %38 : vector<16x64xf32>
    %c0_33 = arith.constant 0 : index
    %c16 = arith.constant 16 : index
    %40 = vector.load %arg6[%c0_33, %c16] : memref<22x88xf32, #tpu.memory_space<vmem>>, vector<16x64xf32>
    %c0_34 = arith.constant 0 : index
    %c4_35 = arith.constant 4 : index
    %c0_36 = arith.constant 0 : index
    %41 = vector.load %arg3[%c0_34, %c4_35, %c0_36] : memref<1x49x64xf32, #tpu.memory_space<vmem>>, vector<1x1x64xf32>
    %42 = vector.shape_cast %41 : vector<1x1x64xf32> to vector<1x64xf32>
    %43 = vector.broadcast %42 : vector<1x64xf32> to vector<16x64xf32>
    %44 = arith.mulf %43, %40 : vector<16x64xf32>
    %45 = arith.addf %39, %44 : vector<16x64xf32>
    %c0_37 = arith.constant 0 : index
    %c20 = arith.constant 20 : index
    %46 = vector.load %arg6[%c0_37, %c20] : memref<22x88xf32, #tpu.memory_space<vmem>>, vector<16x64xf32>
    %c0_38 = arith.constant 0 : index
    %c5 = arith.constant 5 : index
    %c0_39 = arith.constant 0 : index
    %47 = vector.load %arg3[%c0_38, %c5, %c0_39] : memref<1x49x64xf32, #tpu.memory_space<vmem>>, vector<1x1x64xf32>
    %48 = vector.shape_cast %47 : vector<1x1x64xf32> to vector<1x64xf32>
    %49 = vector.broadcast %48 : vector<1x64xf32> to vector<16x64xf32>
    %50 = arith.mulf %49, %46 : vector<16x64xf32>
    %51 = arith.addf %45, %50 : vector<16x64xf32>
    %c0_40 = arith.constant 0 : index
    %c24 = arith.constant 24 : index
    %52 = vector.load %arg6[%c0_40, %c24] : memref<22x88xf32, #tpu.memory_space<vmem>>, vector<16x64xf32>
    %c0_41 = arith.constant 0 : index
    %c6 = arith.constant 6 : index
    %c0_42 = arith.constant 0 : index
    %53 = vector.load %arg3[%c0_41, %c6, %c0_42] : memref<1x49x64xf32, #tpu.memory_space<vmem>>, vector<1x1x64xf32>
    %54 = vector.shape_cast %53 : vector<1x1x64xf32> to vector<1x64xf32>
    %55 = vector.broadcast %54 : vector<1x64xf32> to vector<16x64xf32>
    %56 = arith.mulf %55, %52 : vector<16x64xf32>
    %57 = arith.addf %51, %56 : vector<16x64xf32>
    %c1_43 = arith.constant 1 : index
    %c0_44 = arith.constant 0 : index
    %58 = vector.load %arg6[%c1_43, %c0_44] : memref<22x88xf32, #tpu.memory_space<vmem>>, vector<16x64xf32>
    %c0_45 = arith.constant 0 : index
    %c7 = arith.constant 7 : index
    %c0_46 = arith.constant 0 : index
    %59 = vector.load %arg3[%c0_45, %c7, %c0_46] : memref<1x49x64xf32, #tpu.memory_space<vmem>>, vector<1x1x64xf32>
    %60 = vector.shape_cast %59 : vector<1x1x64xf32> to vector<1x64xf32>
    %61 = vector.broadcast %60 : vector<1x64xf32> to vector<16x64xf32>
    %62 = arith.mulf %61, %58 : vector<16x64xf32>
    %63 = arith.addf %57, %62 : vector<16x64xf32>
    %c1_47 = arith.constant 1 : index
    %c4_48 = arith.constant 4 : index
    %64 = vector.load %arg6[%c1_47, %c4_48] : memref<22x88xf32, #tpu.memory_space<vmem>>, vector<16x64xf32>
    %c0_49 = arith.constant 0 : index
    %c8_50 = arith.constant 8 : index
    %c0_51 = arith.constant 0 : index
    %65 = vector.load %arg3[%c0_49, %c8_50, %c0_51] : memref<1x49x64xf32, #tpu.memory_space<vmem>>, vector<1x1x64xf32>
    %66 = vector.shape_cast %65 : vector<1x1x64xf32> to vector<1x64xf32>
    %67 = vector.broadcast %66 : vector<1x64xf32> to vector<16x64xf32>
    %68 = arith.mulf %67, %64 : vector<16x64xf32>
    %69 = arith.addf %63, %68 : vector<16x64xf32>
    %c1_52 = arith.constant 1 : index
    %c8_53 = arith.constant 8 : index
    %70 = vector.load %arg6[%c1_52, %c8_53] : memref<22x88xf32, #tpu.memory_space<vmem>>, vector<16x64xf32>
    %c0_54 = arith.constant 0 : index
    %c9 = arith.constant 9 : index
    %c0_55 = arith.constant 0 : index
    %71 = vector.load %arg3[%c0_54, %c9, %c0_55] : memref<1x49x64xf32, #tpu.memory_space<vmem>>, vector<1x1x64xf32>
    %72 = vector.shape_cast %71 : vector<1x1x64xf32> to vector<1x64xf32>
    %73 = vector.broadcast %72 : vector<1x64xf32> to vector<16x64xf32>
    %74 = arith.mulf %73, %70 : vector<16x64xf32>
    %75 = arith.addf %69, %74 : vector<16x64xf32>
    %c1_56 = arith.constant 1 : index
    %c12_57 = arith.constant 12 : index
    %76 = vector.load %arg6[%c1_56, %c12_57] : memref<22x88xf32, #tpu.memory_space<vmem>>, vector<16x64xf32>
    %c0_58 = arith.constant 0 : index
    %c10 = arith.constant 10 : index
    %c0_59 = arith.constant 0 : index
    %77 = vector.load %arg3[%c0_58, %c10, %c0_59] : memref<1x49x64xf32, #tpu.memory_space<vmem>>, vector<1x1x64xf32>
    %78 = vector.shape_cast %77 : vector<1x1x64xf32> to vector<1x64xf32>
    %79 = vector.broadcast %78 : vector<1x64xf32> to vector<16x64xf32>
    %80 = arith.mulf %79, %76 : vector<16x64xf32>
    %81 = arith.addf %75, %80 : vector<16x64xf32>
    %c1_60 = arith.constant 1 : index
    %c16_61 = arith.constant 16 : index
    %82 = vector.load %arg6[%c1_60, %c16_61] : memref<22x88xf32, #tpu.memory_space<vmem>>, vector<16x64xf32>
    %c0_62 = arith.constant 0 : index
    %c11 = arith.constant 11 : index
    %c0_63 = arith.constant 0 : index
    %83 = vector.load %arg3[%c0_62, %c11, %c0_63] : memref<1x49x64xf32, #tpu.memory_space<vmem>>, vector<1x1x64xf32>
    %84 = vector.shape_cast %83 : vector<1x1x64xf32> to vector<1x64xf32>
    %85 = vector.broadcast %84 : vector<1x64xf32> to vector<16x64xf32>
    %86 = arith.mulf %85, %82 : vector<16x64xf32>
    %87 = arith.addf %81, %86 : vector<16x64xf32>
    %c1_64 = arith.constant 1 : index
    %c20_65 = arith.constant 20 : index
    %88 = vector.load %arg6[%c1_64, %c20_65] : memref<22x88xf32, #tpu.memory_space<vmem>>, vector<16x64xf32>
    %c0_66 = arith.constant 0 : index
    %c12_67 = arith.constant 12 : index
    %c0_68 = arith.constant 0 : index
    %89 = vector.load %arg3[%c0_66, %c12_67, %c0_68] : memref<1x49x64xf32, #tpu.memory_space<vmem>>, vector<1x1x64xf32>
    %90 = vector.shape_cast %89 : vector<1x1x64xf32> to vector<1x64xf32>
    %91 = vector.broadcast %90 : vector<1x64xf32> to vector<16x64xf32>
    %92 = arith.mulf %91, %88 : vector<16x64xf32>
    %93 = arith.addf %87, %92 : vector<16x64xf32>
    %c1_69 = arith.constant 1 : index
    %c24_70 = arith.constant 24 : index
    %94 = vector.load %arg6[%c1_69, %c24_70] : memref<22x88xf32, #tpu.memory_space<vmem>>, vector<16x64xf32>
    %c0_71 = arith.constant 0 : index
    %c13 = arith.constant 13 : index
    %c0_72 = arith.constant 0 : index
    %95 = vector.load %arg3[%c0_71, %c13, %c0_72] : memref<1x49x64xf32, #tpu.memory_space<vmem>>, vector<1x1x64xf32>
    %96 = vector.shape_cast %95 : vector<1x1x64xf32> to vector<1x64xf32>
    %97 = vector.broadcast %96 : vector<1x64xf32> to vector<16x64xf32>
    %98 = arith.mulf %97, %94 : vector<16x64xf32>
    %99 = arith.addf %93, %98 : vector<16x64xf32>
    %c2_73 = arith.constant 2 : index
    %c0_74 = arith.constant 0 : index
    %100 = vector.load %arg6[%c2_73, %c0_74] : memref<22x88xf32, #tpu.memory_space<vmem>>, vector<16x64xf32>
    %c0_75 = arith.constant 0 : index
    %c14 = arith.constant 14 : index
    %c0_76 = arith.constant 0 : index
    %101 = vector.load %arg3[%c0_75, %c14, %c0_76] : memref<1x49x64xf32, #tpu.memory_space<vmem>>, vector<1x1x64xf32>
    %102 = vector.shape_cast %101 : vector<1x1x64xf32> to vector<1x64xf32>
    %103 = vector.broadcast %102 : vector<1x64xf32> to vector<16x64xf32>
    %104 = arith.mulf %103, %100 : vector<16x64xf32>
    %105 = arith.addf %99, %104 : vector<16x64xf32>
    %c2_77 = arith.constant 2 : index
    %c4_78 = arith.constant 4 : index
    %106 = vector.load %arg6[%c2_77, %c4_78] : memref<22x88xf32, #tpu.memory_space<vmem>>, vector<16x64xf32>
    %c0_79 = arith.constant 0 : index
    %c15 = arith.constant 15 : index
    %c0_80 = arith.constant 0 : index
    %107 = vector.load %arg3[%c0_79, %c15, %c0_80] : memref<1x49x64xf32, #tpu.memory_space<vmem>>, vector<1x1x64xf32>
    %108 = vector.shape_cast %107 : vector<1x1x64xf32> to vector<1x64xf32>
    %109 = vector.broadcast %108 : vector<1x64xf32> to vector<16x64xf32>
    %110 = arith.mulf %109, %106 : vector<16x64xf32>
    %111 = arith.addf %105, %110 : vector<16x64xf32>
    %c2_81 = arith.constant 2 : index
    %c8_82 = arith.constant 8 : index
    %112 = vector.load %arg6[%c2_81, %c8_82] : memref<22x88xf32, #tpu.memory_space<vmem>>, vector<16x64xf32>
    %c0_83 = arith.constant 0 : index
    %c16_84 = arith.constant 16 : index
    %c0_85 = arith.constant 0 : index
    %113 = vector.load %arg3[%c0_83, %c16_84, %c0_85] : memref<1x49x64xf32, #tpu.memory_space<vmem>>, vector<1x1x64xf32>
    %114 = vector.shape_cast %113 : vector<1x1x64xf32> to vector<1x64xf32>
    %115 = vector.broadcast %114 : vector<1x64xf32> to vector<16x64xf32>
    %116 = arith.mulf %115, %112 : vector<16x64xf32>
    %117 = arith.addf %111, %116 : vector<16x64xf32>
    %c2_86 = arith.constant 2 : index
    %c12_87 = arith.constant 12 : index
    %118 = vector.load %arg6[%c2_86, %c12_87] : memref<22x88xf32, #tpu.memory_space<vmem>>, vector<16x64xf32>
    %c0_88 = arith.constant 0 : index
    %c17 = arith.constant 17 : index
    %c0_89 = arith.constant 0 : index
    %119 = vector.load %arg3[%c0_88, %c17, %c0_89] : memref<1x49x64xf32, #tpu.memory_space<vmem>>, vector<1x1x64xf32>
    %120 = vector.shape_cast %119 : vector<1x1x64xf32> to vector<1x64xf32>
    %121 = vector.broadcast %120 : vector<1x64xf32> to vector<16x64xf32>
    %122 = arith.mulf %121, %118 : vector<16x64xf32>
    %123 = arith.addf %117, %122 : vector<16x64xf32>
    %c2_90 = arith.constant 2 : index
    %c16_91 = arith.constant 16 : index
    %124 = vector.load %arg6[%c2_90, %c16_91] : memref<22x88xf32, #tpu.memory_space<vmem>>, vector<16x64xf32>
    %c0_92 = arith.constant 0 : index
    %c18 = arith.constant 18 : index
    %c0_93 = arith.constant 0 : index
    %125 = vector.load %arg3[%c0_92, %c18, %c0_93] : memref<1x49x64xf32, #tpu.memory_space<vmem>>, vector<1x1x64xf32>
    %126 = vector.shape_cast %125 : vector<1x1x64xf32> to vector<1x64xf32>
    %127 = vector.broadcast %126 : vector<1x64xf32> to vector<16x64xf32>
    %128 = arith.mulf %127, %124 : vector<16x64xf32>
    %129 = arith.addf %123, %128 : vector<16x64xf32>
    %c2_94 = arith.constant 2 : index
    %c20_95 = arith.constant 20 : index
    %130 = vector.load %arg6[%c2_94, %c20_95] : memref<22x88xf32, #tpu.memory_space<vmem>>, vector<16x64xf32>
    %c0_96 = arith.constant 0 : index
    %c19_97 = arith.constant 19 : index
    %c0_98 = arith.constant 0 : index
    %131 = vector.load %arg3[%c0_96, %c19_97, %c0_98] : memref<1x49x64xf32, #tpu.memory_space<vmem>>, vector<1x1x64xf32>
    %132 = vector.shape_cast %131 : vector<1x1x64xf32> to vector<1x64xf32>
    %133 = vector.broadcast %132 : vector<1x64xf32> to vector<16x64xf32>
    %134 = arith.mulf %133, %130 : vector<16x64xf32>
    %135 = arith.addf %129, %134 : vector<16x64xf32>
    %c2_99 = arith.constant 2 : index
    %c24_100 = arith.constant 24 : index
    %136 = vector.load %arg6[%c2_99, %c24_100] : memref<22x88xf32, #tpu.memory_space<vmem>>, vector<16x64xf32>
    %c0_101 = arith.constant 0 : index
    %c20_102 = arith.constant 20 : index
    %c0_103 = arith.constant 0 : index
    %137 = vector.load %arg3[%c0_101, %c20_102, %c0_103] : memref<1x49x64xf32, #tpu.memory_space<vmem>>, vector<1x1x64xf32>
    %138 = vector.shape_cast %137 : vector<1x1x64xf32> to vector<1x64xf32>
    %139 = vector.broadcast %138 : vector<1x64xf32> to vector<16x64xf32>
    %140 = arith.mulf %139, %136 : vector<16x64xf32>
    %141 = arith.addf %135, %140 : vector<16x64xf32>
    %c3_104 = arith.constant 3 : index
    %c0_105 = arith.constant 0 : index
    %142 = vector.load %arg6[%c3_104, %c0_105] : memref<22x88xf32, #tpu.memory_space<vmem>>, vector<16x64xf32>
    %c0_106 = arith.constant 0 : index
    %c21 = arith.constant 21 : index
    %c0_107 = arith.constant 0 : index
    %143 = vector.load %arg3[%c0_106, %c21, %c0_107] : memref<1x49x64xf32, #tpu.memory_space<vmem>>, vector<1x1x64xf32>
    %144 = vector.shape_cast %143 : vector<1x1x64xf32> to vector<1x64xf32>
    %145 = vector.broadcast %144 : vector<1x64xf32> to vector<16x64xf32>
    %146 = arith.mulf %145, %142 : vector<16x64xf32>
    %147 = arith.addf %141, %146 : vector<16x64xf32>
    %c3_108 = arith.constant 3 : index
    %c4_109 = arith.constant 4 : index
    %148 = vector.load %arg6[%c3_108, %c4_109] : memref<22x88xf32, #tpu.memory_space<vmem>>, vector<16x64xf32>
    %c0_110 = arith.constant 0 : index
    %c22 = arith.constant 22 : index
    %c0_111 = arith.constant 0 : index
    %149 = vector.load %arg3[%c0_110, %c22, %c0_111] : memref<1x49x64xf32, #tpu.memory_space<vmem>>, vector<1x1x64xf32>
    %150 = vector.shape_cast %149 : vector<1x1x64xf32> to vector<1x64xf32>
    %151 = vector.broadcast %150 : vector<1x64xf32> to vector<16x64xf32>
    %152 = arith.mulf %151, %148 : vector<16x64xf32>
    %153 = arith.addf %147, %152 : vector<16x64xf32>
    %c3_112 = arith.constant 3 : index
    %c8_113 = arith.constant 8 : index
    %154 = vector.load %arg6[%c3_112, %c8_113] : memref<22x88xf32, #tpu.memory_space<vmem>>, vector<16x64xf32>
    %c0_114 = arith.constant 0 : index
    %c23 = arith.constant 23 : index
    %c0_115 = arith.constant 0 : index
    %155 = vector.load %arg3[%c0_114, %c23, %c0_115] : memref<1x49x64xf32, #tpu.memory_space<vmem>>, vector<1x1x64xf32>
    %156 = vector.shape_cast %155 : vector<1x1x64xf32> to vector<1x64xf32>
    %157 = vector.broadcast %156 : vector<1x64xf32> to vector<16x64xf32>
    %158 = arith.mulf %157, %154 : vector<16x64xf32>
    %159 = arith.addf %153, %158 : vector<16x64xf32>
    %c3_116 = arith.constant 3 : index
    %c12_117 = arith.constant 12 : index
    %160 = vector.load %arg6[%c3_116, %c12_117] : memref<22x88xf32, #tpu.memory_space<vmem>>, vector<16x64xf32>
    %c0_118 = arith.constant 0 : index
    %c24_119 = arith.constant 24 : index
    %c0_120 = arith.constant 0 : index
    %161 = vector.load %arg3[%c0_118, %c24_119, %c0_120] : memref<1x49x64xf32, #tpu.memory_space<vmem>>, vector<1x1x64xf32>
    %162 = vector.shape_cast %161 : vector<1x1x64xf32> to vector<1x64xf32>
    %163 = vector.broadcast %162 : vector<1x64xf32> to vector<16x64xf32>
    %164 = arith.mulf %163, %160 : vector<16x64xf32>
    %165 = arith.addf %159, %164 : vector<16x64xf32>
    %c3_121 = arith.constant 3 : index
    %c16_122 = arith.constant 16 : index
    %166 = vector.load %arg6[%c3_121, %c16_122] : memref<22x88xf32, #tpu.memory_space<vmem>>, vector<16x64xf32>
    %c0_123 = arith.constant 0 : index
    %c25 = arith.constant 25 : index
    %c0_124 = arith.constant 0 : index
    %167 = vector.load %arg3[%c0_123, %c25, %c0_124] : memref<1x49x64xf32, #tpu.memory_space<vmem>>, vector<1x1x64xf32>
    %168 = vector.shape_cast %167 : vector<1x1x64xf32> to vector<1x64xf32>
    %169 = vector.broadcast %168 : vector<1x64xf32> to vector<16x64xf32>
    %170 = arith.mulf %169, %166 : vector<16x64xf32>
    %171 = arith.addf %165, %170 : vector<16x64xf32>
    %c3_125 = arith.constant 3 : index
    %c20_126 = arith.constant 20 : index
    %172 = vector.load %arg6[%c3_125, %c20_126] : memref<22x88xf32, #tpu.memory_space<vmem>>, vector<16x64xf32>
    %c0_127 = arith.constant 0 : index
    %c26 = arith.constant 26 : index
    %c0_128 = arith.constant 0 : index
    %173 = vector.load %arg3[%c0_127, %c26, %c0_128] : memref<1x49x64xf32, #tpu.memory_space<vmem>>, vector<1x1x64xf32>
    %174 = vector.shape_cast %173 : vector<1x1x64xf32> to vector<1x64xf32>
    %175 = vector.broadcast %174 : vector<1x64xf32> to vector<16x64xf32>
    %176 = arith.mulf %175, %172 : vector<16x64xf32>
    %177 = arith.addf %171, %176 : vector<16x64xf32>
    %c3_129 = arith.constant 3 : index
    %c24_130 = arith.constant 24 : index
    %178 = vector.load %arg6[%c3_129, %c24_130] : memref<22x88xf32, #tpu.memory_space<vmem>>, vector<16x64xf32>
    %c0_131 = arith.constant 0 : index
    %c27 = arith.constant 27 : index
    %c0_132 = arith.constant 0 : index
    %179 = vector.load %arg3[%c0_131, %c27, %c0_132] : memref<1x49x64xf32, #tpu.memory_space<vmem>>, vector<1x1x64xf32>
    %180 = vector.shape_cast %179 : vector<1x1x64xf32> to vector<1x64xf32>
    %181 = vector.broadcast %180 : vector<1x64xf32> to vector<16x64xf32>
    %182 = arith.mulf %181, %178 : vector<16x64xf32>
    %183 = arith.addf %177, %182 : vector<16x64xf32>
    %c4_133 = arith.constant 4 : index
    %c0_134 = arith.constant 0 : index
    %184 = vector.load %arg6[%c4_133, %c0_134] : memref<22x88xf32, #tpu.memory_space<vmem>>, vector<16x64xf32>
    %c0_135 = arith.constant 0 : index
    %c28 = arith.constant 28 : index
    %c0_136 = arith.constant 0 : index
    %185 = vector.load %arg3[%c0_135, %c28, %c0_136] : memref<1x49x64xf32, #tpu.memory_space<vmem>>, vector<1x1x64xf32>
    %186 = vector.shape_cast %185 : vector<1x1x64xf32> to vector<1x64xf32>
    %187 = vector.broadcast %186 : vector<1x64xf32> to vector<16x64xf32>
    %188 = arith.mulf %187, %184 : vector<16x64xf32>
    %189 = arith.addf %183, %188 : vector<16x64xf32>
    %c4_137 = arith.constant 4 : index
    %c4_138 = arith.constant 4 : index
    %190 = vector.load %arg6[%c4_137, %c4_138] : memref<22x88xf32, #tpu.memory_space<vmem>>, vector<16x64xf32>
    %c0_139 = arith.constant 0 : index
    %c29 = arith.constant 29 : index
    %c0_140 = arith.constant 0 : index
    %191 = vector.load %arg3[%c0_139, %c29, %c0_140] : memref<1x49x64xf32, #tpu.memory_space<vmem>>, vector<1x1x64xf32>
    %192 = vector.shape_cast %191 : vector<1x1x64xf32> to vector<1x64xf32>
    %193 = vector.broadcast %192 : vector<1x64xf32> to vector<16x64xf32>
    %194 = arith.mulf %193, %190 : vector<16x64xf32>
    %195 = arith.addf %189, %194 : vector<16x64xf32>
    %c4_141 = arith.constant 4 : index
    %c8_142 = arith.constant 8 : index
    %196 = vector.load %arg6[%c4_141, %c8_142] : memref<22x88xf32, #tpu.memory_space<vmem>>, vector<16x64xf32>
    %c0_143 = arith.constant 0 : index
    %c30 = arith.constant 30 : index
    %c0_144 = arith.constant 0 : index
    %197 = vector.load %arg3[%c0_143, %c30, %c0_144] : memref<1x49x64xf32, #tpu.memory_space<vmem>>, vector<1x1x64xf32>
    %198 = vector.shape_cast %197 : vector<1x1x64xf32> to vector<1x64xf32>
    %199 = vector.broadcast %198 : vector<1x64xf32> to vector<16x64xf32>
    %200 = arith.mulf %199, %196 : vector<16x64xf32>
    %201 = arith.addf %195, %200 : vector<16x64xf32>
    %c4_145 = arith.constant 4 : index
    %c12_146 = arith.constant 12 : index
    %202 = vector.load %arg6[%c4_145, %c12_146] : memref<22x88xf32, #tpu.memory_space<vmem>>, vector<16x64xf32>
    %c0_147 = arith.constant 0 : index
    %c31 = arith.constant 31 : index
    %c0_148 = arith.constant 0 : index
    %203 = vector.load %arg3[%c0_147, %c31, %c0_148] : memref<1x49x64xf32, #tpu.memory_space<vmem>>, vector<1x1x64xf32>
    %204 = vector.shape_cast %203 : vector<1x1x64xf32> to vector<1x64xf32>
    %205 = vector.broadcast %204 : vector<1x64xf32> to vector<16x64xf32>
    %206 = arith.mulf %205, %202 : vector<16x64xf32>
    %207 = arith.addf %201, %206 : vector<16x64xf32>
    %c4_149 = arith.constant 4 : index
    %c16_150 = arith.constant 16 : index
    %208 = vector.load %arg6[%c4_149, %c16_150] : memref<22x88xf32, #tpu.memory_space<vmem>>, vector<16x64xf32>
    %c0_151 = arith.constant 0 : index
    %c32 = arith.constant 32 : index
    %c0_152 = arith.constant 0 : index
    %209 = vector.load %arg3[%c0_151, %c32, %c0_152] : memref<1x49x64xf32, #tpu.memory_space<vmem>>, vector<1x1x64xf32>
    %210 = vector.shape_cast %209 : vector<1x1x64xf32> to vector<1x64xf32>
    %211 = vector.broadcast %210 : vector<1x64xf32> to vector<16x64xf32>
    %212 = arith.mulf %211, %208 : vector<16x64xf32>
    %213 = arith.addf %207, %212 : vector<16x64xf32>
    %c4_153 = arith.constant 4 : index
    %c20_154 = arith.constant 20 : index
    %214 = vector.load %arg6[%c4_153, %c20_154] : memref<22x88xf32, #tpu.memory_space<vmem>>, vector<16x64xf32>
    %c0_155 = arith.constant 0 : index
    %c33 = arith.constant 33 : index
    %c0_156 = arith.constant 0 : index
    %215 = vector.load %arg3[%c0_155, %c33, %c0_156] : memref<1x49x64xf32, #tpu.memory_space<vmem>>, vector<1x1x64xf32>
    %216 = vector.shape_cast %215 : vector<1x1x64xf32> to vector<1x64xf32>
    %217 = vector.broadcast %216 : vector<1x64xf32> to vector<16x64xf32>
    %218 = arith.mulf %217, %214 : vector<16x64xf32>
    %219 = arith.addf %213, %218 : vector<16x64xf32>
    %c4_157 = arith.constant 4 : index
    %c24_158 = arith.constant 24 : index
    %220 = vector.load %arg6[%c4_157, %c24_158] : memref<22x88xf32, #tpu.memory_space<vmem>>, vector<16x64xf32>
    %c0_159 = arith.constant 0 : index
    %c34 = arith.constant 34 : index
    %c0_160 = arith.constant 0 : index
    %221 = vector.load %arg3[%c0_159, %c34, %c0_160] : memref<1x49x64xf32, #tpu.memory_space<vmem>>, vector<1x1x64xf32>
    %222 = vector.shape_cast %221 : vector<1x1x64xf32> to vector<1x64xf32>
    %223 = vector.broadcast %222 : vector<1x64xf32> to vector<16x64xf32>
    %224 = arith.mulf %223, %220 : vector<16x64xf32>
    %225 = arith.addf %219, %224 : vector<16x64xf32>
    %c5_161 = arith.constant 5 : index
    %c0_162 = arith.constant 0 : index
    %226 = vector.load %arg6[%c5_161, %c0_162] : memref<22x88xf32, #tpu.memory_space<vmem>>, vector<16x64xf32>
    %c0_163 = arith.constant 0 : index
    %c35 = arith.constant 35 : index
    %c0_164 = arith.constant 0 : index
    %227 = vector.load %arg3[%c0_163, %c35, %c0_164] : memref<1x49x64xf32, #tpu.memory_space<vmem>>, vector<1x1x64xf32>
    %228 = vector.shape_cast %227 : vector<1x1x64xf32> to vector<1x64xf32>
    %229 = vector.broadcast %228 : vector<1x64xf32> to vector<16x64xf32>
    %230 = arith.mulf %229, %226 : vector<16x64xf32>
    %231 = arith.addf %225, %230 : vector<16x64xf32>
    %c5_165 = arith.constant 5 : index
    %c4_166 = arith.constant 4 : index
    %232 = vector.load %arg6[%c5_165, %c4_166] : memref<22x88xf32, #tpu.memory_space<vmem>>, vector<16x64xf32>
    %c0_167 = arith.constant 0 : index
    %c36 = arith.constant 36 : index
    %c0_168 = arith.constant 0 : index
    %233 = vector.load %arg3[%c0_167, %c36, %c0_168] : memref<1x49x64xf32, #tpu.memory_space<vmem>>, vector<1x1x64xf32>
    %234 = vector.shape_cast %233 : vector<1x1x64xf32> to vector<1x64xf32>
    %235 = vector.broadcast %234 : vector<1x64xf32> to vector<16x64xf32>
    %236 = arith.mulf %235, %232 : vector<16x64xf32>
    %237 = arith.addf %231, %236 : vector<16x64xf32>
    %c5_169 = arith.constant 5 : index
    %c8_170 = arith.constant 8 : index
    %238 = vector.load %arg6[%c5_169, %c8_170] : memref<22x88xf32, #tpu.memory_space<vmem>>, vector<16x64xf32>
    %c0_171 = arith.constant 0 : index
    %c37 = arith.constant 37 : index
    %c0_172 = arith.constant 0 : index
    %239 = vector.load %arg3[%c0_171, %c37, %c0_172] : memref<1x49x64xf32, #tpu.memory_space<vmem>>, vector<1x1x64xf32>
    %240 = vector.shape_cast %239 : vector<1x1x64xf32> to vector<1x64xf32>
    %241 = vector.broadcast %240 : vector<1x64xf32> to vector<16x64xf32>
    %242 = arith.mulf %241, %238 : vector<16x64xf32>
    %243 = arith.addf %237, %242 : vector<16x64xf32>
    %c5_173 = arith.constant 5 : index
    %c12_174 = arith.constant 12 : index
    %244 = vector.load %arg6[%c5_173, %c12_174] : memref<22x88xf32, #tpu.memory_space<vmem>>, vector<16x64xf32>
    %c0_175 = arith.constant 0 : index
    %c38 = arith.constant 38 : index
    %c0_176 = arith.constant 0 : index
    %245 = vector.load %arg3[%c0_175, %c38, %c0_176] : memref<1x49x64xf32, #tpu.memory_space<vmem>>, vector<1x1x64xf32>
    %246 = vector.shape_cast %245 : vector<1x1x64xf32> to vector<1x64xf32>
    %247 = vector.broadcast %246 : vector<1x64xf32> to vector<16x64xf32>
    %248 = arith.mulf %247, %244 : vector<16x64xf32>
    %249 = arith.addf %243, %248 : vector<16x64xf32>
    %c5_177 = arith.constant 5 : index
    %c16_178 = arith.constant 16 : index
    %250 = vector.load %arg6[%c5_177, %c16_178] : memref<22x88xf32, #tpu.memory_space<vmem>>, vector<16x64xf32>
    %c0_179 = arith.constant 0 : index
    %c39 = arith.constant 39 : index
    %c0_180 = arith.constant 0 : index
    %251 = vector.load %arg3[%c0_179, %c39, %c0_180] : memref<1x49x64xf32, #tpu.memory_space<vmem>>, vector<1x1x64xf32>
    %252 = vector.shape_cast %251 : vector<1x1x64xf32> to vector<1x64xf32>
    %253 = vector.broadcast %252 : vector<1x64xf32> to vector<16x64xf32>
    %254 = arith.mulf %253, %250 : vector<16x64xf32>
    %255 = arith.addf %249, %254 : vector<16x64xf32>
    %c5_181 = arith.constant 5 : index
    %c20_182 = arith.constant 20 : index
    %256 = vector.load %arg6[%c5_181, %c20_182] : memref<22x88xf32, #tpu.memory_space<vmem>>, vector<16x64xf32>
    %c0_183 = arith.constant 0 : index
    %c40 = arith.constant 40 : index
    %c0_184 = arith.constant 0 : index
    %257 = vector.load %arg3[%c0_183, %c40, %c0_184] : memref<1x49x64xf32, #tpu.memory_space<vmem>>, vector<1x1x64xf32>
    %258 = vector.shape_cast %257 : vector<1x1x64xf32> to vector<1x64xf32>
    %259 = vector.broadcast %258 : vector<1x64xf32> to vector<16x64xf32>
    %260 = arith.mulf %259, %256 : vector<16x64xf32>
    %261 = arith.addf %255, %260 : vector<16x64xf32>
    %c5_185 = arith.constant 5 : index
    %c24_186 = arith.constant 24 : index
    %262 = vector.load %arg6[%c5_185, %c24_186] : memref<22x88xf32, #tpu.memory_space<vmem>>, vector<16x64xf32>
    %c0_187 = arith.constant 0 : index
    %c41 = arith.constant 41 : index
    %c0_188 = arith.constant 0 : index
    %263 = vector.load %arg3[%c0_187, %c41, %c0_188] : memref<1x49x64xf32, #tpu.memory_space<vmem>>, vector<1x1x64xf32>
    %264 = vector.shape_cast %263 : vector<1x1x64xf32> to vector<1x64xf32>
    %265 = vector.broadcast %264 : vector<1x64xf32> to vector<16x64xf32>
    %266 = arith.mulf %265, %262 : vector<16x64xf32>
    %267 = arith.addf %261, %266 : vector<16x64xf32>
    %c6_189 = arith.constant 6 : index
    %c0_190 = arith.constant 0 : index
    %268 = vector.load %arg6[%c6_189, %c0_190] : memref<22x88xf32, #tpu.memory_space<vmem>>, vector<16x64xf32>
    %c0_191 = arith.constant 0 : index
    %c42 = arith.constant 42 : index
    %c0_192 = arith.constant 0 : index
    %269 = vector.load %arg3[%c0_191, %c42, %c0_192] : memref<1x49x64xf32, #tpu.memory_space<vmem>>, vector<1x1x64xf32>
    %270 = vector.shape_cast %269 : vector<1x1x64xf32> to vector<1x64xf32>
    %271 = vector.broadcast %270 : vector<1x64xf32> to vector<16x64xf32>
    %272 = arith.mulf %271, %268 : vector<16x64xf32>
    %273 = arith.addf %267, %272 : vector<16x64xf32>
    %c6_193 = arith.constant 6 : index
    %c4_194 = arith.constant 4 : index
    %274 = vector.load %arg6[%c6_193, %c4_194] : memref<22x88xf32, #tpu.memory_space<vmem>>, vector<16x64xf32>
    %c0_195 = arith.constant 0 : index
    %c43 = arith.constant 43 : index
    %c0_196 = arith.constant 0 : index
    %275 = vector.load %arg3[%c0_195, %c43, %c0_196] : memref<1x49x64xf32, #tpu.memory_space<vmem>>, vector<1x1x64xf32>
    %276 = vector.shape_cast %275 : vector<1x1x64xf32> to vector<1x64xf32>
    %277 = vector.broadcast %276 : vector<1x64xf32> to vector<16x64xf32>
    %278 = arith.mulf %277, %274 : vector<16x64xf32>
    %279 = arith.addf %273, %278 : vector<16x64xf32>
    %c6_197 = arith.constant 6 : index
    %c8_198 = arith.constant 8 : index
    %280 = vector.load %arg6[%c6_197, %c8_198] : memref<22x88xf32, #tpu.memory_space<vmem>>, vector<16x64xf32>
    %c0_199 = arith.constant 0 : index
    %c44 = arith.constant 44 : index
    %c0_200 = arith.constant 0 : index
    %281 = vector.load %arg3[%c0_199, %c44, %c0_200] : memref<1x49x64xf32, #tpu.memory_space<vmem>>, vector<1x1x64xf32>
    %282 = vector.shape_cast %281 : vector<1x1x64xf32> to vector<1x64xf32>
    %283 = vector.broadcast %282 : vector<1x64xf32> to vector<16x64xf32>
    %284 = arith.mulf %283, %280 : vector<16x64xf32>
    %285 = arith.addf %279, %284 : vector<16x64xf32>
    %c6_201 = arith.constant 6 : index
    %c12_202 = arith.constant 12 : index
    %286 = vector.load %arg6[%c6_201, %c12_202] : memref<22x88xf32, #tpu.memory_space<vmem>>, vector<16x64xf32>
    %c0_203 = arith.constant 0 : index
    %c45 = arith.constant 45 : index
    %c0_204 = arith.constant 0 : index
    %287 = vector.load %arg3[%c0_203, %c45, %c0_204] : memref<1x49x64xf32, #tpu.memory_space<vmem>>, vector<1x1x64xf32>
    %288 = vector.shape_cast %287 : vector<1x1x64xf32> to vector<1x64xf32>
    %289 = vector.broadcast %288 : vector<1x64xf32> to vector<16x64xf32>
    %290 = arith.mulf %289, %286 : vector<16x64xf32>
    %291 = arith.addf %285, %290 : vector<16x64xf32>
    %c6_205 = arith.constant 6 : index
    %c16_206 = arith.constant 16 : index
    %292 = vector.load %arg6[%c6_205, %c16_206] : memref<22x88xf32, #tpu.memory_space<vmem>>, vector<16x64xf32>
    %c0_207 = arith.constant 0 : index
    %c46 = arith.constant 46 : index
    %c0_208 = arith.constant 0 : index
    %293 = vector.load %arg3[%c0_207, %c46, %c0_208] : memref<1x49x64xf32, #tpu.memory_space<vmem>>, vector<1x1x64xf32>
    %294 = vector.shape_cast %293 : vector<1x1x64xf32> to vector<1x64xf32>
    %295 = vector.broadcast %294 : vector<1x64xf32> to vector<16x64xf32>
    %296 = arith.mulf %295, %292 : vector<16x64xf32>
    %297 = arith.addf %291, %296 : vector<16x64xf32>
    %c6_209 = arith.constant 6 : index
    %c20_210 = arith.constant 20 : index
    %298 = vector.load %arg6[%c6_209, %c20_210] : memref<22x88xf32, #tpu.memory_space<vmem>>, vector<16x64xf32>
    %c0_211 = arith.constant 0 : index
    %c47 = arith.constant 47 : index
    %c0_212 = arith.constant 0 : index
    %299 = vector.load %arg3[%c0_211, %c47, %c0_212] : memref<1x49x64xf32, #tpu.memory_space<vmem>>, vector<1x1x64xf32>
    %300 = vector.shape_cast %299 : vector<1x1x64xf32> to vector<1x64xf32>
    %301 = vector.broadcast %300 : vector<1x64xf32> to vector<16x64xf32>
    %302 = arith.mulf %301, %298 : vector<16x64xf32>
    %303 = arith.addf %297, %302 : vector<16x64xf32>
    %c6_213 = arith.constant 6 : index
    %c24_214 = arith.constant 24 : index
    %304 = vector.load %arg6[%c6_213, %c24_214] : memref<22x88xf32, #tpu.memory_space<vmem>>, vector<16x64xf32>
    %c0_215 = arith.constant 0 : index
    %c48 = arith.constant 48 : index
    %c0_216 = arith.constant 0 : index
    %305 = vector.load %arg3[%c0_215, %c48, %c0_216] : memref<1x49x64xf32, #tpu.memory_space<vmem>>, vector<1x1x64xf32>
    %306 = vector.shape_cast %305 : vector<1x1x64xf32> to vector<1x64xf32>
    %307 = vector.broadcast %306 : vector<1x64xf32> to vector<16x64xf32>
    %308 = arith.mulf %307, %304 : vector<16x64xf32>
    %309 = arith.addf %303, %308 : vector<16x64xf32>
    %310 = vector.broadcast %14 : vector<1x64xf32> to vector<16x64xf32>
    %311 = arith.addf %309, %310 : vector<16x64xf32>
    %c0_217 = arith.constant 0 : index
    %c0_218 = arith.constant 0 : index
    %c0_219 = arith.constant 0 : index
    %c0_220 = arith.constant 0 : index
    %312 = vector.load %arg5[%c0_217, %c0_218, %c0_219, %c0_220] : memref<1x1x16x64xf32, #tpu.memory_space<vmem>>, vector<1x1x16x64xf32>
    %313 = vector.shape_cast %312 : vector<1x1x16x64xf32> to vector<16x64xf32>
    %314 = vector.shape_cast %311 : vector<16x64xf32> to vector<1x1x16x64xf32>
    tpu.vector_store %arg5[%c0_217, %c0_218, %c0_219, %c0_220], %314 {strides = array<i32>} : memref<1x1x16x64xf32, #tpu.memory_space<vmem>>, vector<1x1x16x64xf32>,
    return
  }
  func.func @transform_0(%arg0: i32, %arg1: i32) -> (i32, i32, i32, i32) {
    %c0_i32 = arith.constant 0 : i32
    %c0_i32_0 = arith.constant 0 : i32
    %c0_i32_1 = arith.constant 0 : i32
    return %arg0, %arg1, %c0_i32, %c0_i32_0 : i32, i32, i32, i32
  }
  func.func @transform_1(%arg0: i32, %arg1: i32) -> (i32, i32, i32) {
    %c0_i32 = arith.constant 0 : i32
    %c0_i32_0 = arith.constant 0 : i32
    %c0_i32_1 = arith.constant 0 : i32
    return %arg1, %c0_i32, %c0_i32_0 : i32, i32, i32
  }
  func.func @transform_2(%arg0: i32, %arg1: i32) -> (i32, i32, i32) {
    %c0_i32 = arith.constant 0 : i32
    %c0_i32_0 = arith.constant 0 : i32
    %c0_i32_1 = arith.constant 0 : i32
    return %arg1, %c0_i32, %c0_i32_0 : i32, i32, i32
  }
  func.func @transform_3(%arg0: i32, %arg1: i32) -> (i32, i32, i32, i32) {
    %c0_i32 = arith.constant 0 : i32
    %c0_i32_0 = arith.constant 0 : i32
    %c0_i32_1 = arith.constant 0 : i32
    return %arg0, %arg1, %c0_i32, %c0_i32_0 : i32, i32, i32, i32
  }
}

</mosaic_0001>

<llo_original>
// kernel: tpu_custom_call.1
$region0: #{tpu_custom_call.1}
  #allocation0 [shape = 'u32[]', space=smem, size = 0x4, offset = 0x4, fixed_abs, tag = 'smem constant byte address 0x4 - core index']
  #allocation1 [shape = 'u32[144,128]{1,0:T(1,128)}', space=vmem, size = 0x12000, scoped, tag = 'internal scratch']
  #allocation2 [shape = 'f32[22,88]{1,0:T(8,128)}', space=vmem, size = 0x3000, scoped, tag = 'scratch operand']
  %s0 = inlined_call_operand.vmem [shape: f32[2,1,16,64], index: 0, kind: input, shape index: {}]
  %s1 = inlined_call_operand.vmem [shape: f32[1,49,64], index: 1, kind: input, shape index: {}]
  %s2 = inlined_call_operand.vmem [shape: f32[1,1,64], index: 2, kind: input, shape index: {}]
  %s3 = inlined_call_operand.hbm [shape: f32[2,1,16,64], index: 3, kind: output, shape index: {}]
  %s4 = sld [smem:[#allocation0]]
  $region45: #{tpu_custom_call.1} parent=0
    _
  %s6 = ssub.s32 1, %s4
  %s7 = scalar_select 0, %s6, %s4
  $region1: #{tpu_custom_call.1} parent=0
    #allocation3 [shape = 'u8[16384]{0}', space=vmem, size = 0x4000, scoped, tag = 'output window, operand 0']
    #allocation4 [shape = 's32[2]{0}', space=sflag, size = 0x8, scoped, tag = 'scoped memory for tpu_custom_call.1']
    %8 = vsyncpa [#allocation4], 0
    %s9 = scalar_lea.sflag [#allocation4], 1
    %10 = vsyncpa %s9, 0
    loop: start=0, step=1, limit=4
    $region2: #{tpu_custom_call.1} parent=1 // loop_pre_header
      _
    $region3: #{tpu_custom_call.1} parent=1 // loop_header
      %s12 = sphi 0, %s16
      %p13 = scmp.ge.s32.totalorder %s12, 4
      %s19 = sphi 0, %s31
      %s20 = sphi 0, %s27
      %s21 = sphi 0, %s19
      %s22 = sphi 0, %s20
      %s23 = sphi 0, %s21
      %s24 = sphi 0, %s22
      %s36 = sphi 0, %s38
      %s39 = sphi 0, %s36
      %s40 = sphi 0, %s39
      %s56 = sphi 0, %s40
      %s62 = sphi 0, %s64
      %s65 = sphi 0, %s62
      %s66 = sphi 0, %s65
      %s82 = sphi 0, %s66
      %s88 = sphi 0, %s90
      %s91 = sphi 0, %s88
      %s92 = sphi 0, %s91
      %s108 = sphi 0, %s92
      %s116 = sphi 0, %s118
      %s119 = sphi 0, %s116
      %s120 = sphi 0, %s119
      %s136 = sphi 0, %s120
    $region4: #{tpu_custom_call.1} parent=1 // loop_header_branch
      %15 = sbr.rel (%p13) target = $region8
    $region5: #{tpu_custom_call.1} parent=1 // loop_body
      %s17 = ssub.s32 %s12, 1
      %s18 = ssub.s32 %s12, 2
      %s25 = sadd.s32 1, %s20
      %p26 = scmp.ge.s32.totalorder %s25, 1
      %s27 = scalar_select %p26, 0, %s25
      %s28 = sadd.s32 1, %s19
      %s29 = scalar_select %p26, %s28, %s19
      %p30 = scmp.ge.s32.totalorder %s29, 2
      %s31 = scalar_select %p30, 0, %s29
      %s32 = ssub.s32 %s19, %s31
      %s33 = ssub.s32 %s20, %s27
      %s34 = sor.u32 %s32, %s33
      %p35 = scmp.eq.s32.totalorder %s34, 0
      %s37 = sadd.s32 %s36, 1
      %s38 = scalar_select %p35, %s36, %s37
      %p41 = pneg %p35
      %p42 = scmp.eq.s32.totalorder %s12, 1
      %p43 = por %p41, %p42
      %p44 = scmp.ne.s32.totalorder %s36, %s39
      %p45 = scmp.eq.s32.totalorder %s12, 0
      %p46 = por %p44, %p45
      %p47 = scmp.ne.s32.totalorder %s36, %s39
      %p48 = scmp.eq.s32.totalorder %s17, 1
      %p49 = por %p47, %p48
      %p50 = scmp.ne.s32.totalorder %s39, %s40
      %p51 = scmp.eq.s32.totalorder %s17, 0
      %p52 = por %p50, %p51
      %p53 = scmp.ne.s32.totalorder %s39, %s40
      %p54 = scmp.eq.s32.totalorder %s18, 1
      %p55 = por %p53, %p54
      %p57 = scmp.ne.s32.totalorder %s40, %s56
      %p58 = scmp.eq.s32.totalorder %s18, 0
      %p59 = por %p57, %p58
      %s60 = ssub.s32 %s20, %s27
      %p61 = scmp.eq.s32.totalorder %s60, 0
      %s63 = sadd.s32 %s62, 1
      %s64 = scalar_select %p61, %s62, %s63
      %p67 = pneg %p61
      %p68 = scmp.eq.s32.totalorder %s12, 1
      %p69 = por %p67, %p68
      %p70 = scmp.ne.s32.totalorder %s62, %s65
      %p71 = scmp.eq.s32.totalorder %s12, 0
      %p72 = por %p70, %p71
      %p73 = scmp.ne.s32.totalorder %s62, %s65
      %p74 = scmp.eq.s32.totalorder %s17, 1
      %p75 = por %p73, %p74
      %p76 = scmp.ne.s32.totalorder %s65, %s66
      %p77 = scmp.eq.s32.totalorder %s17, 0
      %p78 = por %p76, %p77
      %p79 = scmp.ne.s32.totalorder %s65, %s66
      %p80 = scmp.eq.s32.totalorder %s18, 1
      %p81 = por %p79, %p80
      %p83 = scmp.ne.s32.totalorder %s66, %s82
      %p84 = scmp.eq.s32.totalorder %s18, 0
      %p85 = por %p83, %p84
      %s86 = ssub.s32 %s20, %s27
      %p87 = scmp.eq.s32.totalorder %s86, 0
      %s89 = sadd.s32 %s88, 1
      %s90 = scalar_select %p87, %s88, %s89
      %p93 = pneg %p87
      %p94 = scmp.eq.s32.totalorder %s12, 1
      %p95 = por %p93, %p94
      %p96 = scmp.ne.s32.totalorder %s88, %s91
      %p97 = scmp.eq.s32.totalorder %s12, 0
      %p98 = por %p96, %p97
      %p99 = scmp.ne.s32.totalorder %s88, %s91
      %p100 = scmp.eq.s32.totalorder %s17, 1
      %p101 = por %p99, %p100
      %p102 = scmp.ne.s32.totalorder %s91, %s92
      %p103 = scmp.eq.s32.totalorder %s17, 0
      %p104 = por %p102, %p103
      %p105 = scmp.ne.s32.totalorder %s91, %s92
      %p106 = scmp.eq.s32.totalorder %s18, 1
      %p107 = por %p105, %p106
      %p109 = scmp.ne.s32.totalorder %s92, %s108
      %p110 = scmp.eq.s32.totalorder %s18, 0
      %p111 = por %p109, %p110
      %s112 = ssub.s32 %s19, %s31
      %s113 = ssub.s32 %s20, %s27
      %s114 = sor.u32 %s112, %s113
      %p115 = scmp.eq.s32.totalorder %s114, 0
      %s117 = sadd.s32 %s116, 1
      %s118 = scalar_select %p115, %s116, %s117
      %p121 = pneg %p115
      %p122 = scmp.eq.s32.totalorder %s12, 1
      %p123 = por %p121, %p122
      %p124 = scmp.ne.s32.totalorder %s116, %s119
      %p125 = scmp.eq.s32.totalorder %s12, 0
      %p126 = por %p124, %p125
      %p127 = scmp.ne.s32.totalorder %s116, %s119
      %p128 = scmp.eq.s32.totalorder %s17, 1
      %p129 = por %p127, %p128
      %p130 = scmp.ne.s32.totalorder %s119, %s120
      %p131 = scmp.eq.s32.totalorder %s17, 0
      %p132 = por %p130, %p131
      %p133 = scmp.ne.s32.totalorder %s119, %s120
      %p134 = scmp.eq.s32.totalorder %s18, 1
      %p135 = por %p133, %p134
      %p137 = scmp.ne.s32.totalorder %s120, %s136
      %p138 = scmp.eq.s32.totalorder %s18, 0
      %p139 = por %p137, %p138
      %p140 = scmp.le.s32.totalorder 1, %s12
      %p141 = scmp.lt.s32.totalorder %s12, 3
      %p142 = pnand %p140, %p141
      %p143 = pneg %p142
      // Predicated region
      $region9: #{tpu_custom_call.1} parent=5 // pred_check
        _
      $region10: #{tpu_custom_call.1} parent=5 // pred_check_branch
        %145 = sbr.rel (%p142) target = $region12
      $region11: #{tpu_custom_call.1} parent=5 // pred_region
        %s146 = ssub.s32 %s12, 1
        // Predicated region
        $region13: #{tpu_custom_call.1} parent=11 // pred_check
          %p147 = pneg %p78
        $region14: #{tpu_custom_call.1} parent=11 // pred_check_branch
          %149 = sbr.rel (%p147) target = $region16
        $region15: #{tpu_custom_call.1} parent=11 // pred_region
          %p150 = scmp.lt.s32.totalorder %s22, 0
          %s151 = scalar_select %p150, %s22, 0
          %s152 = smul.addr %s151, 7
          %s153 = smul.addr %s152, 8
          %s154 = scalar_lea.vmem %s1, %s153
        $region16: #{tpu_custom_call.1} parent=11 // pred_fallthru
          _
        // Predicated region
        $region17: #{tpu_custom_call.1} parent=11 // pred_check
          %p155 = pneg %p104
        $region18: #{tpu_custom_call.1} parent=11 // pred_check_branch
          %157 = sbr.rel (%p155) target = $region20
        $region19: #{tpu_custom_call.1} parent=11 // pred_region
          %p158 = scmp.lt.s32.totalorder %s22, 0
          %s159 = scalar_select %p158, %s22, 0
          %s160 = scalar_lea.vmem %s2, %s159
        $region20: #{tpu_custom_call.1} parent=11 // pred_fallthru
          _
      $region12: #{tpu_custom_call.1} parent=5 // pred_fallthru
        _
      %p161 = scmp.lt.s32.totalorder %s12, 2
      // Predicated region
      $region21: #{tpu_custom_call.1} parent=5 // pred_check
        %p162 = pneg %p161
      $region22: #{tpu_custom_call.1} parent=5 // pred_check_branch
        %164 = sbr.rel (%p162) target = $region24
      $region23: #{tpu_custom_call.1} parent=5 // pred_region
        // Predicated region
        $region25: #{tpu_custom_call.1} parent=23 // pred_check
          %p165 = pneg %p46
        $region26: #{tpu_custom_call.1} parent=23 // pred_check_branch
          %167 = sbr.rel (%p165) target = $region28
        $region27: #{tpu_custom_call.1} parent=23 // pred_region
          %p168 = scmp.lt.s32.totalorder %s19, 1
          %s169 = scalar_select %p168, %s19, 1
          %p170 = scmp.lt.s32.totalorder %s20, 0
          %s171 = scalar_select %p170, %s20, 0
          %s172 = smul.addr %s171, 2
          %s173 = smul.addr %s169, 2
          %s174 = sadd.s32 %s172, %s173
          %s175 = smul.addr %s174, 8
          %s176 = scalar_lea.vmem %s0, %s175
        $region28: #{tpu_custom_call.1} parent=23 // pred_fallthru
          _
      $region24: #{tpu_custom_call.1} parent=5 // pred_fallthru
        _
      %p177 = scmp.le.s32.totalorder 1, %s12
      %p178 = scmp.lt.s32.totalorder %s12, 3
      %p179 = pnand %p177, %p178
      %p180 = pneg %p179
      // Predicated region
      $region29: #{tpu_custom_call.1} parent=5 // pred_check
        _
      $region30: #{tpu_custom_call.1} parent=5 // pred_check_branch
        %182 = sbr.rel (%p179) target = $region32
      $region31: #{tpu_custom_call.1} parent=5 // pred_region
        %s183 = ssub.s32 %s12, 1
        %p184 = scmp.lt.s32.totalorder %s21, 1
        %s185 = scalar_select %p184, %s21, 1
        %p186 = scmp.lt.s32.totalorder %s22, 0
        %s187 = scalar_select %p186, %s22, 0
        %s188 = smul.addr %s187, 2
        %s189 = smul.addr %s185, 2
        %s190 = sadd.s32 %s188, %s189
        %s191 = smul.addr %s190, 8
        %s192 = scalar_lea.vmem %s0, %s191
        %p193 = pneg %p52
        %p194 = pneg %p49
        %p195 = scmp.lt.s32.totalorder %s22, 0
        %s196 = scalar_select %p195, %s22, 0
        %s197 = smul.addr %s196, 7
        %s198 = smul.addr %s197, 8
        %s199 = scalar_lea.vmem %s1, %s198
        %p200 = pneg %p78
        %p201 = pneg %p75
        %p202 = scmp.lt.s32.totalorder %s22, 0
        %s203 = scalar_select %p202, %s22, 0
        %s204 = scalar_lea.vmem %s2, %s203
        %p205 = pneg %p104
        %p206 = pneg %p101
        %p207 = pneg %p132
        %p208 = pneg %p129
        %s209 = sand.u32 %s119, 1
        %s210 = scalar_lea.sflag [#allocation4], %s209
        %s211 = sand.u32 %s119, 1
        %s212 = smul.addr %s211, 16
        %s213 = scalar_lea.vmem [#allocation3], %s212
        %p214 = scmp.lt.s32.totalorder %s21, 1
        %s215 = scalar_select %p214, %s21, 1
        %p216 = scmp.lt.s32.totalorder %s22, 0
        %s217 = scalar_select %p216, %s22, 0
        %s218 = smul.addr %s217, 2
        %s219 = smul.addr %s215, 2
        %s220 = sadd.s32 %s218, %s219
        %s221 = smul.addr %s220, 8
        %s222 = scalar_lea.vmem %s0, %s221
        %p223 = scmp.lt.s32.totalorder %s22, 0
        %s224 = scalar_select %p223, %s22, 0
        %s225 = smul.addr %s224, 7
        %s226 = smul.addr %s225, 8
        %s227 = scalar_lea.vmem %s1, %s226
        %p228 = scmp.lt.s32.totalorder %s22, 0
        %s229 = scalar_select %p228, %s22, 0
        %s230 = scalar_lea.vmem %s2, %s229
        %vm231 = vcmask 714752
        %232 = vst.msk [vmem:[#allocation2] sm:$0x7] %vm231, 0.0
        %233 = vst.msk [vmem:[#allocation2 + $0x13] sm:$0x7] %vm231, 0.0
        %vm234 = vcmask 97280
        %235 = vst.msk [vmem:[#allocation2 + $0x3] sm:$0xff] %vm234, 0.0
        %236 = vst.msk [vmem:[#allocation2 + $0xb] sm:$0xff] %vm234, 0.0
        %vm237 = vcmask 720480
        %238 = vst.msk [vmem:[#allocation2 + $0x3] sm:$0xff] %vm237, 0.0
        %239 = vst.msk [vmem:[#allocation2 + $0xb] sm:$0xff] %vm237, 0.0
        %v240 = vld [vmem:[%s222] sm:$0xff]
        %v241 = vld [vmem:[%s222 + $0x8] sm:$0xff]
        %v242 = vmax.f32 %v240, 0.0
        %v243 = vmax.f32 %v241, 0.0
        %246 = vrot.lane.b32.xlu0 %v242, 12
        %v247 = vpop.permute.xlu0 %246
        %248 = vrot.lane.b32.xlu0 %v243, 12
        %v249 = vpop.permute.xlu0 %248
        %vm252 = vcmask 621664
        %253 = vst.msk [vmem:[#allocation2 + $0x3] sm:$0xff] %vm252, %v247
        %254 = vst.msk [vmem:[#allocation2 + $0xb] sm:$0xff] %vm252, %v249
        %v255 = vld [vmem:[%s230] sm:$0x1]
        %v256 = vld [vmem:[#allocation2] sm:$0xff]
        %v257 = vld [vmem:[#allocation2 + $0x8] sm:$0xff]
        %v258 = vld [vmem:[%s227] sm:$0x1]
        %v259 = vlaneseq
        %v260 = vshrl.u32 %v259, 7
        %v261 = vsub.s32 0, %v260
        %v262 = vrot.slane %v258, %v261
        %v263 = vmul.f32 %v262, %v256
        %v264 = vmul.f32 %v262, %v257
        %v265 = vadd.f32 %v263, 0.0
        %v266 = vadd.f32 %v264, 0.0
        %v267 = vld [vmem:[%s227 + $0x1] sm:$0x1]
        %v268 = vlaneseq
        %v269 = vshrl.u32 %v268, 7
        %v270 = vsub.s32 0, %v269
        %v271 = vrot.slane %v267, %v270
        %274 = vrot.lane.b32.xlu0 %v256, 124
        %v275 = vpop.permute.xlu0 %274
        %276 = vrot.lane.b32.xlu0 %v257, 124
        %v277 = vpop.permute.xlu0 %276
        %v280 = vmul.f32 %v271, %v275
        %v281 = vmul.f32 %v271, %v277
        %v282 = vadd.f32 %v265, %v280
        %v283 = vadd.f32 %v266, %v281
        %v284 = vld [vmem:[%s227 + $0x2] sm:$0x1]
        %v285 = vlaneseq
        %v286 = vshrl.u32 %v285, 7
        %v287 = vsub.s32 0, %v286
        %v288 = vrot.slane %v284, %v287
        %289 = vrot.lane.b32.xlu0 %v256, 120
        %v290 = vpop.permute.xlu0 %289
        %291 = vrot.lane.b32.xlu0 %v257, 120
        %v292 = vpop.permute.xlu0 %291
        %v295 = vmul.f32 %v288, %v290
        %v296 = vmul.f32 %v288, %v292
        %v297 = vadd.f32 %v282, %v295
        %v298 = vadd.f32 %v283, %v296
        %v299 = vld [vmem:[%s227 + $0x3] sm:$0x1]
        %v300 = vlaneseq
        %v301 = vshrl.u32 %v300, 7
        %v302 = vsub.s32 0, %v301
        %v303 = vrot.slane %v299, %v302
        %304 = vrot.lane.b32.xlu0 %v256, 116
        %v305 = vpop.permute.xlu0 %304
        %306 = vrot.lane.b32.xlu0 %v257, 116
        %v307 = vpop.permute.xlu0 %306
        %v310 = vmul.f32 %v303, %v305
        %v311 = vmul.f32 %v303, %v307
        %v312 = vadd.f32 %v297, %v310
        %v313 = vadd.f32 %v298, %v311
        %v314 = vld [vmem:[%s227 + $0x4] sm:$0x1]
        %v315 = vlaneseq
        %v316 = vshrl.u32 %v315, 7
        %v317 = vsub.s32 0, %v316
        %v318 = vrot.slane %v314, %v317
        %319 = vrot.lane.b32.xlu0 %v256, 112
        %v320 = vpop.permute.xlu0 %319
        %321 = vrot.lane.b32.xlu0 %v257, 112
        %v322 = vpop.permute.xlu0 %321
        %v325 = vmul.f32 %v318, %v320
        %v326 = vmul.f32 %v318, %v322
        %v327 = vadd.f32 %v312, %v325
        %v328 = vadd.f32 %v313, %v326
        %v329 = vld [vmem:[%s227 + $0x5] sm:$0x1]
        %v330 = vlaneseq
        %v331 = vshrl.u32 %v330, 7
        %v332 = vsub.s32 0, %v331
        %v333 = vrot.slane %v329, %v332
        %334 = vrot.lane.b32.xlu0 %v256, 108
        %v335 = vpop.permute.xlu0 %334
        %336 = vrot.lane.b32.xlu0 %v257, 108
        %v337 = vpop.permute.xlu0 %336
        %v340 = vmul.f32 %v333, %v335
        %v341 = vmul.f32 %v333, %v337
        %v342 = vadd.f32 %v327, %v340
        %v343 = vadd.f32 %v328, %v341
        %v344 = vld [vmem:[%s227 + $0x6] sm:$0x1]
        %v345 = vlaneseq
        %v346 = vshrl.u32 %v345, 7
        %v347 = vsub.s32 0, %v346
        %v348 = vrot.slane %v344, %v347
        %349 = vrot.lane.b32.xlu0 %v256, 104
        %v350 = vpop.permute.xlu0 %349
        %351 = vrot.lane.b32.xlu0 %v257, 104
        %v352 = vpop.permute.xlu0 %351
        %v355 = vmul.f32 %v348, %v350
        %v356 = vmul.f32 %v348, %v352
        %v357 = vadd.f32 %v342, %v355
        %v358 = vadd.f32 %v343, %v356
        %v359 = vld [vmem:[#allocation2 + $0x1] sm:$0xff]
        %v360 = vld [vmem:[#allocation2 + $0x9] sm:$0xff]
        %v361 = vld [vmem:[%s227 + $0x7] sm:$0x1]
        %v362 = vlaneseq
        %v363 = vshrl.u32 %v362, 7
        %v364 = vsub.s32 0, %v363
        %v365 = vrot.slane %v361, %v364
        %v366 = vmul.f32 %v365, %v359
        %v367 = vmul.f32 %v365, %v360
        %v368 = vadd.f32 %v357, %v366
        %v369 = vadd.f32 %v358, %v367
        %v370 = vld [vmem:[%s227 + $0x8] sm:$0x1]
        %v371 = vlaneseq
        %v372 = vshrl.u32 %v371, 7
        %v373 = vsub.s32 0, %v372
        %v374 = vrot.slane %v370, %v373
        %377 = vrot.lane.b32.xlu0 %v359, 124
        %v378 = vpop.permute.xlu0 %377
        %379 = vrot.lane.b32.xlu0 %v360, 124
        %v380 = vpop.permute.xlu0 %379
        %v383 = vmul.f32 %v374, %v378
        %v384 = vmul.f32 %v374, %v380
        %v385 = vadd.f32 %v368, %v383
        %v386 = vadd.f32 %v369, %v384
        %v387 = vld [vmem:[%s227 + $0x9] sm:$0x1]
        %v388 = vlaneseq
        %v389 = vshrl.u32 %v388, 7
        %v390 = vsub.s32 0, %v389
        %v391 = vrot.slane %v387, %v390
        %392 = vrot.lane.b32.xlu0 %v359, 120
        %v393 = vpop.permute.xlu0 %392
        %394 = vrot.lane.b32.xlu0 %v360, 120
        %v395 = vpop.permute.xlu0 %394
        %v398 = vmul.f32 %v391, %v393
        %v399 = vmul.f32 %v391, %v395
        %v400 = vadd.f32 %v385, %v398
        %v401 = vadd.f32 %v386, %v399
        %v402 = vld [vmem:[%s227 + $0xa] sm:$0x1]
        %v403 = vlaneseq
        %v404 = vshrl.u32 %v403, 7
        %v405 = vsub.s32 0, %v404
        %v406 = vrot.slane %v402, %v405
        %407 = vrot.lane.b32.xlu0 %v359, 116
        %v408 = vpop.permute.xlu0 %407
        %409 = vrot.lane.b32.xlu0 %v360, 116
        %v410 = vpop.permute.xlu0 %409
        %v413 = vmul.f32 %v406, %v408
        %v414 = vmul.f32 %v406, %v410
        %v415 = vadd.f32 %v400, %v413
        %v416 = vadd.f32 %v401, %v414
        %v417 = vld [vmem:[%s227 + $0xb] sm:$0x1]
        %v418 = vlaneseq
        %v419 = vshrl.u32 %v418, 7
        %v420 = vsub.s32 0, %v419
        %v421 = vrot.slane %v417, %v420
        %422 = vrot.lane.b32.xlu0 %v359, 112
        %v423 = vpop.permute.xlu0 %422
        %424 = vrot.lane.b32.xlu0 %v360, 112
        %v425 = vpop.permute.xlu0 %424
        %v428 = vmul.f32 %v421, %v423
        %v429 = vmul.f32 %v421, %v425
        %v430 = vadd.f32 %v415, %v428
        %v431 = vadd.f32 %v416, %v429
        %v432 = vld [vmem:[%s227 + $0xc] sm:$0x1]
        %v433 = vlaneseq
        %v434 = vshrl.u32 %v433, 7
        %v435 = vsub.s32 0, %v434
        %v436 = vrot.slane %v432, %v435
        %437 = vrot.lane.b32.xlu0 %v359, 108
        %v438 = vpop.permute.xlu0 %437
        %439 = vrot.lane.b32.xlu0 %v360, 108
        %v440 = vpop.permute.xlu0 %439
        %v443 = vmul.f32 %v436, %v438
        %v444 = vmul.f32 %v436, %v440
        %v445 = vadd.f32 %v430, %v443
        %v446 = vadd.f32 %v431, %v444
        %v447 = vld [vmem:[%s227 + $0xd] sm:$0x1]
        %v448 = vlaneseq
        %v449 = vshrl.u32 %v448, 7
        %v450 = vsub.s32 0, %v449
        %v451 = vrot.slane %v447, %v450
        %452 = vrot.lane.b32.xlu0 %v359, 104
        %v453 = vpop.permute.xlu0 %452
        %454 = vrot.lane.b32.xlu0 %v360, 104
        %v455 = vpop.permute.xlu0 %454
        %v458 = vmul.f32 %v451, %v453
        %v459 = vmul.f32 %v451, %v455
        %v460 = vadd.f32 %v445, %v458
        %v461 = vadd.f32 %v446, %v459
        %v462 = vld [vmem:[#allocation2 + $0x2] sm:$0xff]
        %v463 = vld [vmem:[#allocation2 + $0xa] sm:$0xff]
        %v464 = vld [vmem:[%s227 + $0xe] sm:$0x1]
        %v465 = vlaneseq
        %v466 = vshrl.u32 %v465, 7
        %v467 = vsub.s32 0, %v466
        %v468 = vrot.slane %v464, %v467
        %v469 = vmul.f32 %v468, %v462
        %v470 = vmul.f32 %v468, %v463
        %v471 = vadd.f32 %v460, %v469
        %v472 = vadd.f32 %v461, %v470
        %v473 = vld [vmem:[%s227 + $0xf] sm:$0x1]
        %v474 = vlaneseq
        %v475 = vshrl.u32 %v474, 7
        %v476 = vsub.s32 0, %v475
        %v477 = vrot.slane %v473, %v476
        %480 = vrot.lane.b32.xlu0 %v462, 124
        %v481 = vpop.permute.xlu0 %480
        %482 = vrot.lane.b32.xlu0 %v463, 124
        %v483 = vpop.permute.xlu0 %482
        %v486 = vmul.f32 %v477, %v481
        %v487 = vmul.f32 %v477, %v483
        %v488 = vadd.f32 %v471, %v486
        %v489 = vadd.f32 %v472, %v487
        %v490 = vld [vmem:[%s227 + $0x10] sm:$0x1]
        %v491 = vlaneseq
        %v492 = vshrl.u32 %v491, 7
        %v493 = vsub.s32 0, %v492
        %v494 = vrot.slane %v490, %v493
        %495 = vrot.lane.b32.xlu0 %v462, 120
        %v496 = vpop.permute.xlu0 %495
        %497 = vrot.lane.b32.xlu0 %v463, 120
        %v498 = vpop.permute.xlu0 %497
        %v501 = vmul.f32 %v494, %v496
        %v502 = vmul.f32 %v494, %v498
        %v503 = vadd.f32 %v488, %v501
        %v504 = vadd.f32 %v489, %v502
        %v505 = vld [vmem:[%s227 + $0x11] sm:$0x1]
        %v506 = vlaneseq
        %v507 = vshrl.u32 %v506, 7
        %v508 = vsub.s32 0, %v507
        %v509 = vrot.slane %v505, %v508
        %510 = vrot.lane.b32.xlu0 %v462, 116
        %v511 = vpop.permute.xlu0 %510
        %512 = vrot.lane.b32.xlu0 %v463, 116
        %v513 = vpop.permute.xlu0 %512
        %v516 = vmul.f32 %v509, %v511
        %v517 = vmul.f32 %v509, %v513
        %v518 = vadd.f32 %v503, %v516
        %v519 = vadd.f32 %v504, %v517
        %v520 = vld [vmem:[%s227 + $0x12] sm:$0x1]
        %v521 = vlaneseq
        %v522 = vshrl.u32 %v521, 7
        %v523 = vsub.s32 0, %v522
        %v524 = vrot.slane %v520, %v523
        %525 = vrot.lane.b32.xlu0 %v462, 112
        %v526 = vpop.permute.xlu0 %525
        %527 = vrot.lane.b32.xlu0 %v463, 112
        %v528 = vpop.permute.xlu0 %527
        %v531 = vmul.f32 %v524, %v526
        %v532 = vmul.f32 %v524, %v528
        %v533 = vadd.f32 %v518, %v531
        %v534 = vadd.f32 %v519, %v532
        %v535 = vld [vmem:[%s227 + $0x13] sm:$0x1]
        %v536 = vlaneseq
        %v537 = vshrl.u32 %v536, 7
        %v538 = vsub.s32 0, %v537
        %v539 = vrot.slane %v535, %v538
        %540 = vrot.lane.b32.xlu0 %v462, 108
        %v541 = vpop.permute.xlu0 %540
        %542 = vrot.lane.b32.xlu0 %v463, 108
        %v543 = vpop.permute.xlu0 %542
        %v546 = vmul.f32 %v539, %v541
        %v547 = vmul.f32 %v539, %v543
        %v548 = vadd.f32 %v533, %v546
        %v549 = vadd.f32 %v534, %v547
        %v550 = vld [vmem:[%s227 + $0x14] sm:$0x1]
        %v551 = vlaneseq
        %v552 = vshrl.u32 %v551, 7
        %v553 = vsub.s32 0, %v552
        %v554 = vrot.slane %v550, %v553
        %555 = vrot.lane.b32.xlu0 %v462, 104
        %v556 = vpop.permute.xlu0 %555
        %557 = vrot.lane.b32.xlu0 %v463, 104
        %v558 = vpop.permute.xlu0 %557
        %v561 = vmul.f32 %v554, %v556
        %v562 = vmul.f32 %v554, %v558
        %v563 = vadd.f32 %v548, %v561
        %v564 = vadd.f32 %v549, %v562
        %v565 = vld [vmem:[#allocation2 + $0x3] sm:$0xff]
        %v566 = vld [vmem:[#allocation2 + $0xb] sm:$0xff]
        %v567 = vld [vmem:[%s227 + $0x15] sm:$0x1]
        %v568 = vlaneseq
        %v569 = vshrl.u32 %v568, 7
        %v570 = vsub.s32 0, %v569
        %v571 = vrot.slane %v567, %v570
        %v572 = vmul.f32 %v571, %v565
        %v573 = vmul.f32 %v571, %v566
        %v574 = vadd.f32 %v563, %v572
        %v575 = vadd.f32 %v564, %v573
        %v576 = vld [vmem:[%s227 + $0x16] sm:$0x1]
        %v577 = vlaneseq
        %v578 = vshrl.u32 %v577, 7
        %v579 = vsub.s32 0, %v578
        %v580 = vrot.slane %v576, %v579
        %583 = vrot.lane.b32.xlu0 %v565, 124
        %v584 = vpop.permute.xlu0 %583
        %585 = vrot.lane.b32.xlu0 %v566, 124
        %v586 = vpop.permute.xlu0 %585
        %v589 = vmul.f32 %v580, %v584
        %v590 = vmul.f32 %v580, %v586
        %v591 = vadd.f32 %v574, %v589
        %v592 = vadd.f32 %v575, %v590
        %v593 = vld [vmem:[%s227 + $0x17] sm:$0x1]
        %v594 = vlaneseq
        %v595 = vshrl.u32 %v594, 7
        %v596 = vsub.s32 0, %v595
        %v597 = vrot.slane %v593, %v596
        %598 = vrot.lane.b32.xlu0 %v565, 120
        %v599 = vpop.permute.xlu0 %598
        %600 = vrot.lane.b32.xlu0 %v566, 120
        %v601 = vpop.permute.xlu0 %600
        %v604 = vmul.f32 %v597, %v599
        %v605 = vmul.f32 %v597, %v601
        %v606 = vadd.f32 %v591, %v604
        %v607 = vadd.f32 %v592, %v605
        %v608 = vld [vmem:[%s227 + $0x18] sm:$0x1]
        %v609 = vlaneseq
        %v610 = vshrl.u32 %v609, 7
        %v611 = vsub.s32 0, %v610
        %v612 = vrot.slane %v608, %v611
        %613 = vrot.lane.b32.xlu0 %v565, 116
        %v614 = vpop.permute.xlu0 %613
        %615 = vrot.lane.b32.xlu0 %v566, 116
        %v616 = vpop.permute.xlu0 %615
        %v619 = vmul.f32 %v612, %v614
        %v620 = vmul.f32 %v612, %v616
        %v621 = vadd.f32 %v606, %v619
        %v622 = vadd.f32 %v607, %v620
        %v623 = vld [vmem:[%s227 + $0x19] sm:$0x1]
        %v624 = vlaneseq
        %v625 = vshrl.u32 %v624, 7
        %v626 = vsub.s32 0, %v625
        %v627 = vrot.slane %v623, %v626
        %628 = vrot.lane.b32.xlu0 %v565, 112
        %v629 = vpop.permute.xlu0 %628
        %630 = vrot.lane.b32.xlu0 %v566, 112
        %v631 = vpop.permute.xlu0 %630
        %v634 = vmul.f32 %v627, %v629
        %v635 = vmul.f32 %v627, %v631
        %v636 = vadd.f32 %v621, %v634
        %v637 = vadd.f32 %v622, %v635
        %v638 = vld [vmem:[%s227 + $0x1a] sm:$0x1]
        %v639 = vlaneseq
        %v640 = vshrl.u32 %v639, 7
        %v641 = vsub.s32 0, %v640
        %v642 = vrot.slane %v638, %v641
        %643 = vrot.lane.b32.xlu0 %v565, 108
        %v644 = vpop.permute.xlu0 %643
        %645 = vrot.lane.b32.xlu0 %v566, 108
        %v646 = vpop.permute.xlu0 %645
        %v649 = vmul.f32 %v642, %v644
        %v650 = vmul.f32 %v642, %v646
        %v651 = vadd.f32 %v636, %v649
        %v652 = vadd.f32 %v637, %v650
        %v653 = vld [vmem:[%s227 + $0x1b] sm:$0x1]
        %v654 = vlaneseq
        %v655 = vshrl.u32 %v654, 7
        %v656 = vsub.s32 0, %v655
        %v657 = vrot.slane %v653, %v656
        %658 = vrot.lane.b32.xlu0 %v565, 104
        %v659 = vpop.permute.xlu0 %658
        %660 = vrot.lane.b32.xlu0 %v566, 104
        %v661 = vpop.permute.xlu0 %660
        %v664 = vmul.f32 %v657, %v659
        %v665 = vmul.f32 %v657, %v661
        %v666 = vadd.f32 %v651, %v664
        %v667 = vadd.f32 %v652, %v665
        %v668 = vld [vmem:[#allocation2 + $0x4] sm:$0xff]
        %v669 = vld [vmem:[#allocation2 + $0xc] sm:$0xff]
        %v670 = vld [vmem:[%s227 + $0x1c] sm:$0x1]
        %v671 = vlaneseq
        %v672 = vshrl.u32 %v671, 7
        %v673 = vsub.s32 0, %v672
        %v674 = vrot.slane %v670, %v673
        %v675 = vmul.f32 %v674, %v668
        %v676 = vmul.f32 %v674, %v669
        %v677 = vadd.f32 %v666, %v675
        %v678 = vadd.f32 %v667, %v676
        %v679 = vld [vmem:[%s227 + $0x1d] sm:$0x1]
        %v680 = vlaneseq
        %v681 = vshrl.u32 %v680, 7
        %v682 = vsub.s32 0, %v681
        %v683 = vrot.slane %v679, %v682
        %686 = vrot.lane.b32.xlu0 %v668, 124
        %v687 = vpop.permute.xlu0 %686
        %688 = vrot.lane.b32.xlu0 %v669, 124
        %v689 = vpop.permute.xlu0 %688
        %v692 = vmul.f32 %v683, %v687
        %v693 = vmul.f32 %v683, %v689
        %v694 = vadd.f32 %v677, %v692
        %v695 = vadd.f32 %v678, %v693
        %v696 = vld [vmem:[%s227 + $0x1e] sm:$0x1]
        %v697 = vlaneseq
        %v698 = vshrl.u32 %v697, 7
        %v699 = vsub.s32 0, %v698
        %v700 = vrot.slane %v696, %v699
        %701 = vrot.lane.b32.xlu0 %v668, 120
        %v702 = vpop.permute.xlu0 %701
        %703 = vrot.lane.b32.xlu0 %v669, 120
        %v704 = vpop.permute.xlu0 %703
        %v707 = vmul.f32 %v700, %v702
        %v708 = vmul.f32 %v700, %v704
        %v709 = vadd.f32 %v694, %v707
        %v710 = vadd.f32 %v695, %v708
        %v711 = vld [vmem:[%s227 + $0x1f] sm:$0x1]
        %v712 = vlaneseq
        %v713 = vshrl.u32 %v712, 7
        %v714 = vsub.s32 0, %v713
        %v715 = vrot.slane %v711, %v714
        %716 = vrot.lane.b32.xlu0 %v668, 116
        %v717 = vpop.permute.xlu0 %716
        %718 = vrot.lane.b32.xlu0 %v669, 116
        %v719 = vpop.permute.xlu0 %718
        %v722 = vmul.f32 %v715, %v717
        %v723 = vmul.f32 %v715, %v719
        %v724 = vadd.f32 %v709, %v722
        %v725 = vadd.f32 %v710, %v723
        %v726 = vld [vmem:[%s227 + $0x20] sm:$0x1]
        %v727 = vlaneseq
        %v728 = vshrl.u32 %v727, 7
        %v729 = vsub.s32 0, %v728
        %v730 = vrot.slane %v726, %v729
        %731 = vrot.lane.b32.xlu0 %v668, 112
        %v732 = vpop.permute.xlu0 %731
        %733 = vrot.lane.b32.xlu0 %v669, 112
        %v734 = vpop.permute.xlu0 %733
        %v737 = vmul.f32 %v730, %v732
        %v738 = vmul.f32 %v730, %v734
        %v739 = vadd.f32 %v724, %v737
        %v740 = vadd.f32 %v725, %v738
        %v741 = vld [vmem:[%s227 + $0x21] sm:$0x1]
        %v742 = vlaneseq
        %v743 = vshrl.u32 %v742, 7
        %v744 = vsub.s32 0, %v743
        %v745 = vrot.slane %v741, %v744
        %746 = vrot.lane.b32.xlu0 %v668, 108
        %v747 = vpop.permute.xlu0 %746
        %748 = vrot.lane.b32.xlu0 %v669, 108
        %v749 = vpop.permute.xlu0 %748
        %v752 = vmul.f32 %v745, %v747
        %v753 = vmul.f32 %v745, %v749
        %v754 = vadd.f32 %v739, %v752
        %v755 = vadd.f32 %v740, %v753
        %v756 = vld [vmem:[%s227 + $0x22] sm:$0x1]
        %v757 = vlaneseq
        %v758 = vshrl.u32 %v757, 7
        %v759 = vsub.s32 0, %v758
        %v760 = vrot.slane %v756, %v759
        %761 = vrot.lane.b32.xlu0 %v668, 104
        %v762 = vpop.permute.xlu0 %761
        %763 = vrot.lane.b32.xlu0 %v669, 104
        %v764 = vpop.permute.xlu0 %763
        %v767 = vmul.f32 %v760, %v762
        %v768 = vmul.f32 %v760, %v764
        %v769 = vadd.f32 %v754, %v767
        %v770 = vadd.f32 %v755, %v768
        %v771 = vld [vmem:[#allocation2 + $0x5] sm:$0xff]
        %v772 = vld [vmem:[#allocation2 + $0xd] sm:$0xff]
        %v773 = vld [vmem:[%s227 + $0x23] sm:$0x1]
        %v774 = vlaneseq
        %v775 = vshrl.u32 %v774, 7
        %v776 = vsub.s32 0, %v775
        %v777 = vrot.slane %v773, %v776
        %v778 = vmul.f32 %v777, %v771
        %v779 = vmul.f32 %v777, %v772
        %v780 = vadd.f32 %v769, %v778
        %v781 = vadd.f32 %v770, %v779
        %v782 = vld [vmem:[%s227 + $0x24] sm:$0x1]
        %v783 = vlaneseq
        %v784 = vshrl.u32 %v783, 7
        %v785 = vsub.s32 0, %v784
        %v786 = vrot.slane %v782, %v785
        %789 = vrot.lane.b32.xlu0 %v771, 124
        %v790 = vpop.permute.xlu0 %789
        %791 = vrot.lane.b32.xlu0 %v772, 124
        %v792 = vpop.permute.xlu0 %791
        %v795 = vmul.f32 %v786, %v790
        %v796 = vmul.f32 %v786, %v792
        %v797 = vadd.f32 %v780, %v795
        %v798 = vadd.f32 %v781, %v796
        %v799 = vld [vmem:[%s227 + $0x25] sm:$0x1]
        %v800 = vlaneseq
        %v801 = vshrl.u32 %v800, 7
        %v802 = vsub.s32 0, %v801
        %v803 = vrot.slane %v799, %v802
        %804 = vrot.lane.b32.xlu0 %v771, 120
        %v805 = vpop.permute.xlu0 %804
        %806 = vrot.lane.b32.xlu0 %v772, 120
        %v807 = vpop.permute.xlu0 %806
        %v810 = vmul.f32 %v803, %v805
        %v811 = vmul.f32 %v803, %v807
        %v812 = vadd.f32 %v797, %v810
        %v813 = vadd.f32 %v798, %v811
        %v814 = vld [vmem:[%s227 + $0x26] sm:$0x1]
        %v815 = vlaneseq
        %v816 = vshrl.u32 %v815, 7
        %v817 = vsub.s32 0, %v816
        %v818 = vrot.slane %v814, %v817
        %819 = vrot.lane.b32.xlu0 %v771, 116
        %v820 = vpop.permute.xlu0 %819
        %821 = vrot.lane.b32.xlu0 %v772, 116
        %v822 = vpop.permute.xlu0 %821
        %v825 = vmul.f32 %v818, %v820
        %v826 = vmul.f32 %v818, %v822
        %v827 = vadd.f32 %v812, %v825
        %v828 = vadd.f32 %v813, %v826
        %v829 = vld [vmem:[%s227 + $0x27] sm:$0x1]
        %v830 = vlaneseq
        %v831 = vshrl.u32 %v830, 7
        %v832 = vsub.s32 0, %v831
        %v833 = vrot.slane %v829, %v832
        %834 = vrot.lane.b32.xlu0 %v771, 112
        %v835 = vpop.permute.xlu0 %834
        %836 = vrot.lane.b32.xlu0 %v772, 112
        %v837 = vpop.permute.xlu0 %836
        %v840 = vmul.f32 %v833, %v835
        %v841 = vmul.f32 %v833, %v837
        %v842 = vadd.f32 %v827, %v840
        %v843 = vadd.f32 %v828, %v841
        %v844 = vld [vmem:[%s227 + $0x28] sm:$0x1]
        %v845 = vlaneseq
        %v846 = vshrl.u32 %v845, 7
        %v847 = vsub.s32 0, %v846
        %v848 = vrot.slane %v844, %v847
        %849 = vrot.lane.b32.xlu0 %v771, 108
        %v850 = vpop.permute.xlu0 %849
        %851 = vrot.lane.b32.xlu0 %v772, 108
        %v852 = vpop.permute.xlu0 %851
        %v855 = vmul.f32 %v848, %v850
        %v856 = vmul.f32 %v848, %v852
        %v857 = vadd.f32 %v842, %v855
        %v858 = vadd.f32 %v843, %v856
        %v859 = vld [vmem:[%s227 + $0x29] sm:$0x1]
        %v860 = vlaneseq
        %v861 = vshrl.u32 %v860, 7
        %v862 = vsub.s32 0, %v861
        %v863 = vrot.slane %v859, %v862
        %864 = vrot.lane.b32.xlu0 %v771, 104
        %v865 = vpop.permute.xlu0 %864
        %866 = vrot.lane.b32.xlu0 %v772, 104
        %v867 = vpop.permute.xlu0 %866
        %v870 = vmul.f32 %v863, %v865
        %v871 = vmul.f32 %v863, %v867
        %v872 = vadd.f32 %v857, %v870
        %v873 = vadd.f32 %v858, %v871
        %v874 = vld [vmem:[#allocation2 + $0x6] sm:$0xff]
        %v875 = vld [vmem:[#allocation2 + $0xe] sm:$0xff]
        %v876 = vld [vmem:[%s227 + $0x2a] sm:$0x1]
        %v877 = vlaneseq
        %v878 = vshrl.u32 %v877, 7
        %v879 = vsub.s32 0, %v878
        %v880 = vrot.slane %v876, %v879
        %v881 = vmul.f32 %v880, %v874
        %v882 = vmul.f32 %v880, %v875
        %v883 = vadd.f32 %v872, %v881
        %v884 = vadd.f32 %v873, %v882
        %v885 = vld [vmem:[%s227 + $0x2b] sm:$0x1]
        %v886 = vlaneseq
        %v887 = vshrl.u32 %v886, 7
        %v888 = vsub.s32 0, %v887
        %v889 = vrot.slane %v885, %v888
        %892 = vrot.lane.b32.xlu0 %v874, 124
        %v893 = vpop.permute.xlu0 %892
        %894 = vrot.lane.b32.xlu0 %v875, 124
        %v895 = vpop.permute.xlu0 %894
        %v898 = vmul.f32 %v889, %v893
        %v899 = vmul.f32 %v889, %v895
        %v900 = vadd.f32 %v883, %v898
        %v901 = vadd.f32 %v884, %v899
        %v902 = vld [vmem:[%s227 + $0x2c] sm:$0x1]
        %v903 = vlaneseq
        %v904 = vshrl.u32 %v903, 7
        %v905 = vsub.s32 0, %v904
        %v906 = vrot.slane %v902, %v905
        %907 = vrot.lane.b32.xlu0 %v874, 120
        %v908 = vpop.permute.xlu0 %907
        %909 = vrot.lane.b32.xlu0 %v875, 120
        %v910 = vpop.permute.xlu0 %909
        %v913 = vmul.f32 %v906, %v908
        %v914 = vmul.f32 %v906, %v910
        %v915 = vadd.f32 %v900, %v913
        %v916 = vadd.f32 %v901, %v914
        %v917 = vld [vmem:[%s227 + $0x2d] sm:$0x1]
        %v918 = vlaneseq
        %v919 = vshrl.u32 %v918, 7
        %v920 = vsub.s32 0, %v919
        %v921 = vrot.slane %v917, %v920
        %922 = vrot.lane.b32.xlu0 %v874, 116
        %v923 = vpop.permute.xlu0 %922
        %924 = vrot.lane.b32.xlu0 %v875, 116
        %v925 = vpop.permute.xlu0 %924
        %v928 = vmul.f32 %v921, %v923
        %v929 = vmul.f32 %v921, %v925
        %v930 = vadd.f32 %v915, %v928
        %v931 = vadd.f32 %v916, %v929
        %v932 = vld [vmem:[%s227 + $0x2e] sm:$0x1]
        %v933 = vlaneseq
        %v934 = vshrl.u32 %v933, 7
        %v935 = vsub.s32 0, %v934
        %v936 = vrot.slane %v932, %v935
        %937 = vrot.lane.b32.xlu0 %v874, 112
        %v938 = vpop.permute.xlu0 %937
        %939 = vrot.lane.b32.xlu0 %v875, 112
        %v940 = vpop.permute.xlu0 %939
        %v943 = vmul.f32 %v936, %v938
        %v944 = vmul.f32 %v936, %v940
        %v945 = vadd.f32 %v930, %v943
        %v946 = vadd.f32 %v931, %v944
        %v947 = vld [vmem:[%s227 + $0x2f] sm:$0x1]
        %v948 = vlaneseq
        %v949 = vshrl.u32 %v948, 7
        %v950 = vsub.s32 0, %v949
        %v951 = vrot.slane %v947, %v950
        %952 = vrot.lane.b32.xlu0 %v874, 108
        %v953 = vpop.permute.xlu0 %952
        %954 = vrot.lane.b32.xlu0 %v875, 108
        %v955 = vpop.permute.xlu0 %954
        %v958 = vmul.f32 %v951, %v953
        %v959 = vmul.f32 %v951, %v955
        %v960 = vadd.f32 %v945, %v958
        %v961 = vadd.f32 %v946, %v959
        %v962 = vld [vmem:[%s227 + $0x30] sm:$0x1]
        %v963 = vlaneseq
        %v964 = vshrl.u32 %v963, 7
        %v965 = vsub.s32 0, %v964
        %v966 = vrot.slane %v962, %v965
        %967 = vrot.lane.b32.xlu0 %v874, 104
        %v968 = vpop.permute.xlu0 %967
        %969 = vrot.lane.b32.xlu0 %v875, 104
        %v970 = vpop.permute.xlu0 %969
        %v973 = vmul.f32 %v966, %v968
        %v974 = vmul.f32 %v966, %v970
        %v975 = vadd.f32 %v960, %v973
        %v976 = vadd.f32 %v961, %v974
        %v978 = vlaneseq
        %v979 = vshrl.u32 %v978, 7
        %v980 = vsub.s32 0, %v979
        %v981 = vrot.slane %v255, %v980
        %v983 = vadd.f32 %v975, %v981
        %v984 = vadd.f32 %v976, %v981
        %vm985 = vcmask 523264
        %986 = vst.msk [vmem:[%s213] sm:$0xff] %vm985, %v983
        %987 = vst.msk [vmem:[%s213 + $0x8] sm:$0xff] %vm985, %v984
        %s988 = sand.u32 %s119, 1
        %s989 = scalar_lea.sflag [#allocation4], %s988
        %s990 = sand.u32 %s119, 1
        %s991 = smul.addr %s990, 16
        %s992 = scalar_lea.vmem [#allocation3], %s991
        // Predicated region
        $region33: #{tpu_custom_call.1} parent=31 // pred_check
          %p993 = pneg %p129
        $region34: #{tpu_custom_call.1} parent=31 // pred_check_branch
          %995 = sbr.rel (%p993) target = $region36
        $region35: #{tpu_custom_call.1} parent=31 // pred_region
          %s997 = ssub.s32 256, 256
          %998 = vsyncadd %s989, %s997
          %s999 = smul.addr %s22, 2
          %s1000 = smul.addr %s21, 2
          %s1001 = sadd.s32 %s999, %s1000
          %s1002 = smul.addr %s1001, 128
          %s1003 = scalar_lea.hbm %s3, %s1002
          %s1004 = sshll.u32 %s992, 4
          %s1005 = int_to_ptr.vmem [resolvable:$true] %s1004
          %1010 = dma.vmem_to_hbm [thread:$0]  %s1005, 256, %s1003, %s989, 128, 128, 8
        $region36: #{tpu_custom_call.1} parent=31 // pred_fallthru
          _
      $region32: #{tpu_custom_call.1} parent=5 // pred_fallthru
        _
      %p1011 = scmp.le.s32.totalorder 2, %s12
      // Predicated region
      $region37: #{tpu_custom_call.1} parent=5 // pred_check
        %p1012 = pneg %p1011
      $region38: #{tpu_custom_call.1} parent=5 // pred_check_branch
        %1014 = sbr.rel (%p1012) target = $region40
      $region39: #{tpu_custom_call.1} parent=5 // pred_region
        %s1015 = ssub.s32 %s12, 2
        // Predicated region
        $region41: #{tpu_custom_call.1} parent=39 // pred_check
          %p1016 = pneg %p135
        $region42: #{tpu_custom_call.1} parent=39 // pred_check_branch
          %1018 = sbr.rel (%p1016) target = $region44
        $region43: #{tpu_custom_call.1} parent=39 // pred_region
          %s1019 = sand.u32 %s120, 1
          %s1020 = scalar_lea.sflag [#allocation4], %s1019
          %s1021 = sand.u32 %s120, 1
          %s1022 = smul.addr %s1021, 16
          %s1023 = scalar_lea.vmem [#allocation3], %s1022
          %1024 = dma.done %s1020, 256
        $region44: #{tpu_custom_call.1} parent=39 // pred_fallthru
          _
      $region40: #{tpu_custom_call.1} parent=5 // pred_fallthru
        _
    $region6: #{tpu_custom_call.1} parent=1 // loop_footer
      %s16 = sadd.s32 1, %s12
    $region7: #{tpu_custom_call.1} parent=1 // loop_footer_branch
      %11 = sbr.rel target = $region3
    $region8: #{tpu_custom_call.1} parent=1 // loop_exit
      _
    %1025 = vsyncpa [#allocation4], 1
    %s1026 = scalar_lea.sflag [#allocation4], 1
    %1027 = vsyncpa %s1026, 1

</llo_original>
